<compile_context>
chip_gen: v7x
topology: tpu7x:2x2x1
jax: 0.10.0
libtpu: 0.0.40
codegen_flags: <defaults>
</compile_context>

<pallas_src>
import jax
import jax.numpy as jnp
from jax.experimental import pallas as pl
from jax.experimental.pallas import tpu as pltpu


def _round_up(n, m):
    return ((n + m - 1) // m) * m


def decoder_kernel(x_ref, w1_ref, b1_ref, w2_ref, b2_ref, o_ref):
    # Layer 1: (TB, latent) @ (latent, hidden_p) -> f32 accumulate, bias, ReLU.
    h = jnp.dot(x_ref[...], w1_ref[...], preferred_element_type=jnp.float32)
    h = jnp.maximum(h + b1_ref[...], 0.0)

    # Layer 2: (TB, hidden_p) @ (hidden_p, out_p) -> f32 accumulate, bias.
    o = jnp.dot(h.astype(jnp.bfloat16), w2_ref[...],
                preferred_element_type=jnp.float32)
    o = o + b2_ref[...]

    # Sigmoid epilogue: 1 / (1 + exp(-o)); exp on EUP, approx reciprocal on EUP.
    o_ref[...] = pl.reciprocal(1.0 + jnp.exp(-o), approx=True).astype(o_ref.dtype)


def decoder_forward(x, w1, b1, w2, b2, output_h, output_w, batch_tile=256):
    """x: (B, latent) f32 -> (B, 1, output_h, output_w) f32.

    w1: (latent, hidden)  = PyTorch fc1.weight.T
    b1: (1, hidden)
    w2: (hidden, H*W)     = PyTorch fc2.weight.T
    b2: (1, H*W)
    """
    B, latent = x.shape
    hidden = w1.shape[1]
    out_dim = output_h * output_w

    # Lane-align feature dims (multiples of 128) and pick a batch tile.
    hidden_p = _round_up(hidden, 128)
    out_p = _round_up(out_dim, 128)
    if B <= batch_tile:
        tb = _round_up(B, 8)
    else:
        tb = batch_tile
    B_p = _round_up(B, tb)
    num_tiles = B_p // tb

    # Zero-pad (exact) and cast matmul operands to bf16; biases stay f32.
    x_p = jnp.pad(x.astype(jnp.bfloat16), ((0, B_p - B), (0, 0)))
    w1_p = jnp.pad(w1.astype(jnp.bfloat16), ((0, 0), (0, hidden_p - hidden)))
    b1_p = jnp.pad(b1.astype(jnp.float32), ((0, 0), (0, hidden_p - hidden)))
    w2_p = jnp.pad(w2.astype(jnp.bfloat16),
                   ((0, hidden_p - hidden), (0, out_p - out_dim)))
    b2_p = jnp.pad(b2.astype(jnp.float32), ((0, 0), (0, out_p - out_dim)))

    out2d = pl.pallas_call(
        decoder_kernel,
        out_shape=jax.ShapeDtypeStruct((B_p, out_p), jnp.float32),
        grid=(num_tiles,),
        in_specs=[
            pl.BlockSpec((tb, latent), lambda i: (i, 0)),        # x tile
            pl.BlockSpec((latent, hidden_p), lambda i: (0, 0)),  # w1 resident
            pl.BlockSpec((1, hidden_p), lambda i: (0, 0)),       # b1 resident
            pl.BlockSpec((hidden_p, out_p), lambda i: (0, 0)),   # w2 resident
            pl.BlockSpec((1, out_p), lambda i: (0, 0)),          # b2 resident
        ],
        out_specs=pl.BlockSpec((tb, out_p), lambda i: (i, 0)),
        compiler_params=pltpu.CompilerParams(
            dimension_semantics=("parallel",),
            vmem_limit_bytes=32 << 20,
        ),
    )(x_p, w1_p, b1_p, w2_p, b2_p)

    # Slice off batch / lane padding and view as NCHW, like x.view(-1,1,H,W).
    return out2d[:B, :out_dim].reshape(B, 1, output_h, output_w)


if __name__ == "__main__":
    # Small shapes consistent with the module defaults.
    output_h, output_w = 28, 28
    hidden_size = 400
    latent_size = 10
    batch = 16          # small, but tiled with tb=8 to exercise the grid

    key = jax.random.PRNGKey(0)
    k_x, k_w1, k_b1, k_w2, k_b2 = jax.random.split(key, 5)

    # Deterministic parameter init (PyTorch Linear shapes, stored transposed
    # for row-major matmul: weight^T).
    x = jax.random.normal(k_x, (batch, latent_size), dtype=jnp.float32)
    lim1 = 1.0 / jnp.sqrt(latent_size)
    w1 = jax.random.uniform(k_w1, (latent_size, hidden_size),
                            minval=-lim1, maxval=lim1, dtype=jnp.float32)
    b1 = jax.random.uniform(k_b1, (1, hidden_size),
                            minval=-lim1, maxval=lim1, dtype=jnp.float32)
    lim2 = 1.0 / jnp.sqrt(hidden_size)
    w2 = jax.random.uniform(k_w2, (hidden_size, output_h * output_w),
                            minval=-lim2, maxval=lim2, dtype=jnp.float32)
    b2 = jax.random.uniform(k_b2, (1, output_h * output_w),
                            minval=-lim2, maxval=lim2, dtype=jnp.float32)

    out = decoder_forward(x, w1, b1, w2, b2, output_h, output_w, batch_tile=8)
    out = jax.block_until_ready(out)

    # Sanity check against plain f32 JAX reference (relaxed tolerance for the
    # bf16 matmul inputs + approx reciprocal in the sigmoid epilogue).
    ref = jax.nn.sigmoid(
        jnp.maximum(x @ w1 + b1, 0.0) @ w2 + b2
    ).reshape(batch, 1, output_h, output_w)
    assert out.shape == (batch, 1, output_h, output_w)
    assert jnp.allclose(out, ref, atol=3e-2, rtol=3e-2), (
        float(jnp.max(jnp.abs(out - ref))))

    print("KERNEL_OK")
</pallas_src>

<mosaic_0001>
module attributes {stable_mosaic.version = 11 : i64} {
  func.func @decoder_kernel(%arg0: i32, %arg1: memref<8x10xbf16, #tpu.memory_space<vmem>>, %arg2: memref<10x512xbf16, #tpu.memory_space<vmem>>, %arg3: memref<1x512xf32, #tpu.memory_space<vmem>>, %arg4: memref<512x896xbf16, #tpu.memory_space<vmem>>, %arg5: memref<1x896xf32, #tpu.memory_space<vmem>>, %arg6: memref<8x896xf32, #tpu.memory_space<vmem>>) attributes {dimension_semantics = [#tpu.dimension_semantics<parallel>], iteration_bounds = array<i64: 2>, scalar_prefetch = 0 : i64, scratch_operands = 0 : i64, tpu.core_type = #tpu.core_type<tc>, window_params = [{transform_indices = @transform_0, window_bounds = array<i64: 8, 10>}, {pipeline_mode = #tpu.pipeline_mode<synchronous>, transform_indices = @transform_1, window_bounds = array<i64: 10, 512>}, {pipeline_mode = #tpu.pipeline_mode<synchronous>, transform_indices = @transform_2, window_bounds = array<i64: 1, 512>}, {pipeline_mode = #tpu.pipeline_mode<synchronous>, transform_indices = @transform_3, window_bounds = array<i64: 512, 896>}, {pipeline_mode = #tpu.pipeline_mode<synchronous>, transform_indices = @transform_4, window_bounds = array<i64: 1, 896>}, {transform_indices = @transform_5, window_bounds = array<i64: 8, 896>}]} {
    %c0 = arith.constant 0 : index
    %c0_0 = arith.constant 0 : index
    %0 = vector.load %arg1[%c0, %c0_0] : memref<8x10xbf16, #tpu.memory_space<vmem>>, vector<8x10xbf16>
    %c0_1 = arith.constant 0 : index
    %c0_2 = arith.constant 0 : index
    %1 = vector.load %arg2[%c0_1, %c0_2] : memref<10x512xbf16, #tpu.memory_space<vmem>>, vector<10x512xbf16>
    %cst = arith.constant dense<0.000000e+00> : vector<8x512xf32>
    %2 = tpu.matmul %0, %1, %cst {dimension_numbers = #tpu.dot_dimension_numbers<[1], [0], [0], [1], [0, 0, 1, 1], [], []>} : vector<8x10xbf16>, vector<10x512xbf16>, vector<8x512xf32> -> vector<8x512xf32>
    %c0_3 = arith.constant 0 : index
    %c0_4 = arith.constant 0 : index
    %3 = vector.load %arg3[%c0_3, %c0_4] : memref<1x512xf32, #tpu.memory_space<vmem>>, vector<1x512xf32>
    %4 = vector.broadcast %3 : vector<1x512xf32> to vector<8x512xf32>
    %5 = arith.addf %2, %4 : vector<8x512xf32>
    %cst_5 = arith.constant 0.000000e+00 : f32
    %6 = vector.broadcast %cst_5 : f32 to vector<8x512xf32>
    %7 = arith.maximumf %5, %6 : vector<8x512xf32>
    %8 = arith.truncf %7 : vector<8x512xf32> to vector<8x512xbf16>
    %c0_6 = arith.constant 0 : index
    %c0_7 = arith.constant 0 : index
    %9 = vector.load %arg4[%c0_6, %c0_7] : memref<512x896xbf16, #tpu.memory_space<vmem>>, vector<512x896xbf16>
    %cst_8 = arith.constant dense<0.000000e+00> : vector<8x896xf32>
    %10 = tpu.matmul %8, %9, %cst_8 {dimension_numbers = #tpu.dot_dimension_numbers<[1], [0], [0], [1], [0, 0, 1, 1], [], []>} : vector<8x512xbf16>, vector<512x896xbf16>, vector<8x896xf32> -> vector<8x896xf32>
    %c0_9 = arith.constant 0 : index
    %c0_10 = arith.constant 0 : index
    %11 = vector.load %arg5[%c0_9, %c0_10] : memref<1x896xf32, #tpu.memory_space<vmem>>, vector<1x896xf32>
    %12 = vector.broadcast %11 : vector<1x896xf32> to vector<8x896xf32>
    %13 = arith.addf %10, %12 : vector<8x896xf32>
    %cst_11 = arith.constant 0.000000e+00 : f32
    %14 = vector.broadcast %cst_11 : f32 to vector<8x896xf32>
    %15 = arith.subf %14, %13 : vector<8x896xf32>
    %16 = math.exp %15 : vector<8x896xf32>
    %cst_12 = arith.constant 1.000000e+00 : f32
    %17 = vector.broadcast %cst_12 : f32 to vector<8x896xf32>
    %18 = arith.addf %17, %16 : vector<8x896xf32>
    %19 = tpu.reciprocal %18 {approx = true} : vector<8x896xf32> -> vector<8x896xf32>
    %c0_13 = arith.constant 0 : index
    %c0_14 = arith.constant 0 : index
    %20 = vector.load %arg6[%c0_13, %c0_14] : memref<8x896xf32, #tpu.memory_space<vmem>>, vector<8x896xf32>
    tpu.vector_store %arg6[%c0_13, %c0_14], %19 {strides = array<i32>} : memref<8x896xf32, #tpu.memory_space<vmem>>, vector<8x896xf32>,
    return
  }
  func.func @transform_0(%arg0: i32) -> (i32, i32) {
    %c0_i32 = arith.constant 0 : i32
    %c0_i32_0 = arith.constant 0 : i32
    return %arg0, %c0_i32 : i32, i32
  }
  func.func @transform_1(%arg0: i32) -> (i32, i32) {
    %c0_i32 = arith.constant 0 : i32
    %c0_i32_0 = arith.constant 0 : i32
    %c0_i32_1 = arith.constant 0 : i32
    return %c0_i32, %c0_i32_0 : i32, i32
  }
  func.func @transform_2(%arg0: i32) -> (i32, i32) {
    %c0_i32 = arith.constant 0 : i32
    %c0_i32_0 = arith.constant 0 : i32
    %c0_i32_1 = arith.constant 0 : i32
    return %c0_i32, %c0_i32_0 : i32, i32
  }
  func.func @transform_3(%arg0: i32) -> (i32, i32) {
    %c0_i32 = arith.constant 0 : i32
    %c0_i32_0 = arith.constant 0 : i32
    %c0_i32_1 = arith.constant 0 : i32
    return %c0_i32, %c0_i32_0 : i32, i32
  }
  func.func @transform_4(%arg0: i32) -> (i32, i32) {
    %c0_i32 = arith.constant 0 : i32
    %c0_i32_0 = arith.constant 0 : i32
    %c0_i32_1 = arith.constant 0 : i32
    return %c0_i32, %c0_i32_0 : i32, i32
  }
  func.func @transform_5(%arg0: i32) -> (i32, i32) {
    %c0_i32 = arith.constant 0 : i32
    %c0_i32_0 = arith.constant 0 : i32
    return %arg0, %c0_i32 : i32, i32
  }
}

</mosaic_0001>

<llo_original>
// kernel: tpu_custom_call.1
$region0: #{tpu_custom_call.1}
  #allocation0 [shape = 'u32[]', space=smem, size = 0x4, offset = 0x4, fixed_abs, tag = 'smem constant byte address 0x4 - core index']
  #allocation1 [shape = 'u32[144,128]{1,0:T(1,128)}', space=vmem, size = 0x12000, scoped, tag = 'internal scratch']
  %s0 = inlined_call_operand.hbm [shape: bf16[16,10], index: 0, kind: input, shape index: {}]
  %s1 = inlined_call_operand.hbm [shape: bf16[10,512], index: 1, kind: input, shape index: {}]
  %s2 = inlined_call_operand.vmem [shape: f32[1,512], index: 2, kind: input, shape index: {}]
  %s3 = inlined_call_operand.hbm [shape: bf16[512,896], index: 3, kind: input, shape index: {}]
  %s4 = inlined_call_operand.vmem [shape: f32[1,896], index: 4, kind: input, shape index: {}]
  %s5 = inlined_call_operand.hbm [shape: f32[16,896], index: 5, kind: output, shape index: {}]
  %s6 = sld [smem:[#allocation0]]
  $region65: #{tpu_custom_call.1} parent=0
    _
  %s8 = ssub.s32 1, %s6
  %s9 = scalar_select 0, %s8, %s6
  $region1: #{tpu_custom_call.1} parent=0
    #allocation2 [shape = 'u8[4096]{0}', space=vmem, size = 0x1000, scoped, tag = 'input window, operand 0']
    #allocation3 [shape = 's32[2]{0}', space=sflag, size = 0x8, scoped, tag = 'scoped memory for tpu_custom_call.1']
    #allocation4 [shape = 's32[2]{0}', space=sflag, size = 0x8, scoped, tag = 'scoped memory for tpu_custom_call.1']
    #allocation5 [shape = 'u8[16384]{0}', space=vmem, size = 0x4000, scoped, tag = 'input window, operand 1, single buffered']
    #allocation6 [shape = 's32[1]{0}', space=sflag, size = 0x4, scoped, tag = 'scoped memory for tpu_custom_call.1']
    #allocation7 [shape = 'u8[917504]{0}', space=vmem, size = 0xe0000, scoped, tag = 'input window, operand 3, single buffered']
    #allocation8 [shape = 'u8[57344]{0}', space=vmem, size = 0xe000, scoped, tag = 'output window, operand 0']
    %10 = vsyncpa [#allocation3], 0
    %s11 = scalar_lea.sflag [#allocation3], 1
    %12 = vsyncpa %s11, 0
    %13 = vsyncpa [#allocation6], 0
    %14 = vsyncpa [#allocation4], 0
    %s15 = scalar_lea.sflag [#allocation4], 1
    %16 = vsyncpa %s15, 0
    loop: start=0, step=1, limit=4
    $region2: #{tpu_custom_call.1} parent=1 // loop_pre_header
      _
    $region3: #{tpu_custom_call.1} parent=1 // loop_header
      %s18 = sphi 0, %s22
      %p19 = scmp.ge.s32.totalorder %s18, 4
      %s28 = sphi 0, %s30
      %s31 = sphi 0, %s28
      %s32 = sphi 0, %s31
      %s48 = sphi 0, %s32
      %s52 = sphi 0, %s52
      %s54 = sphi 0, %s52
      %s55 = sphi 0, %s54
      %s69 = sphi 0, %s55
      %s73 = sphi 0, %s73
      %s75 = sphi 0, %s73
      %s76 = sphi 0, %s75
      %s90 = sphi 0, %s76
      %s94 = sphi 0, %s94
      %s96 = sphi 0, %s94
      %s97 = sphi 0, %s96
      %s111 = sphi 0, %s97
      %s115 = sphi 0, %s115
      %s117 = sphi 0, %s115
      %s118 = sphi 0, %s117
      %s132 = sphi 0, %s118
      %s138 = sphi 0, %s140
      %s141 = sphi 0, %s138
      %s142 = sphi 0, %s141
      %s158 = sphi 0, %s142
    $region4: #{tpu_custom_call.1} parent=1 // loop_header_branch
      %21 = sbr.rel (%p19) target = $region8
    $region5: #{tpu_custom_call.1} parent=1 // loop_body
      %s23 = ssub.s32 %s18, 1
      %s24 = ssub.s32 %s18, 2
      %s25 = sadd.s32 %s18, 1
      %s26 = ssub.s32 %s18, %s25
      %p27 = scmp.eq.s32.totalorder %s26, 0
      %s29 = sadd.s32 %s28, 1
      %s30 = scalar_select %p27, %s28, %s29
      %p33 = pneg %p27
      %p34 = scmp.eq.s32.totalorder %s18, 1
      %p35 = por %p33, %p34
      %p36 = scmp.ne.s32.totalorder %s28, %s31
      %p37 = scmp.eq.s32.totalorder %s18, 0
      %p38 = por %p36, %p37
      %p39 = scmp.ne.s32.totalorder %s28, %s31
      %p40 = scmp.eq.s32.totalorder %s23, 1
      %p41 = por %p39, %p40
      %p42 = scmp.ne.s32.totalorder %s31, %s32
      %p43 = scmp.eq.s32.totalorder %s23, 0
      %p44 = por %p42, %p43
      %p45 = scmp.ne.s32.totalorder %s31, %s32
      %p46 = scmp.eq.s32.totalorder %s24, 1
      %p47 = por %p45, %p46
      %p49 = scmp.ne.s32.totalorder %s32, %s48
      %p50 = scmp.eq.s32.totalorder %s24, 0
      %p51 = por %p49, %p50
      %s53 = sadd.s32 %s52, 1
      %p56 = scmp.eq.s32.totalorder %s18, 1
      %p57 = scmp.ne.s32.totalorder %s52, %s54
      %p58 = scmp.eq.s32.totalorder %s18, 0
      %p59 = por %p57, %p58
      %p60 = scmp.ne.s32.totalorder %s52, %s54
      %p61 = scmp.eq.s32.totalorder %s23, 1
      %p62 = por %p60, %p61
      %p63 = scmp.ne.s32.totalorder %s54, %s55
      %p64 = scmp.eq.s32.totalorder %s23, 0
      %p65 = por %p63, %p64
      %p66 = scmp.ne.s32.totalorder %s54, %s55
      %p67 = scmp.eq.s32.totalorder %s24, 1
      %p68 = por %p66, %p67
      %p70 = scmp.ne.s32.totalorder %s55, %s69
      %p71 = scmp.eq.s32.totalorder %s24, 0
      %p72 = por %p70, %p71
      %s74 = sadd.s32 %s73, 1
      %p77 = scmp.eq.s32.totalorder %s18, 1
      %p78 = scmp.ne.s32.totalorder %s73, %s75
      %p79 = scmp.eq.s32.totalorder %s18, 0
      %p80 = por %p78, %p79
      %p81 = scmp.ne.s32.totalorder %s73, %s75
      %p82 = scmp.eq.s32.totalorder %s23, 1
      %p83 = por %p81, %p82
      %p84 = scmp.ne.s32.totalorder %s75, %s76
      %p85 = scmp.eq.s32.totalorder %s23, 0
      %p86 = por %p84, %p85
      %p87 = scmp.ne.s32.totalorder %s75, %s76
      %p88 = scmp.eq.s32.totalorder %s24, 1
      %p89 = por %p87, %p88
      %p91 = scmp.ne.s32.totalorder %s76, %s90
      %p92 = scmp.eq.s32.totalorder %s24, 0
      %p93 = por %p91, %p92
      %s95 = sadd.s32 %s94, 1
      %p98 = scmp.eq.s32.totalorder %s18, 1
      %p99 = scmp.ne.s32.totalorder %s94, %s96
      %p100 = scmp.eq.s32.totalorder %s18, 0
      %p101 = por %p99, %p100
      %p102 = scmp.ne.s32.totalorder %s94, %s96
      %p103 = scmp.eq.s32.totalorder %s23, 1
      %p104 = por %p102, %p103
      %p105 = scmp.ne.s32.totalorder %s96, %s97
      %p106 = scmp.eq.s32.totalorder %s23, 0
      %p107 = por %p105, %p106
      %p108 = scmp.ne.s32.totalorder %s96, %s97
      %p109 = scmp.eq.s32.totalorder %s24, 1
      %p110 = por %p108, %p109
      %p112 = scmp.ne.s32.totalorder %s97, %s111
      %p113 = scmp.eq.s32.totalorder %s24, 0
      %p114 = por %p112, %p113
      %s116 = sadd.s32 %s115, 1
      %p119 = scmp.eq.s32.totalorder %s18, 1
      %p120 = scmp.ne.s32.totalorder %s115, %s117
      %p121 = scmp.eq.s32.totalorder %s18, 0
      %p122 = por %p120, %p121
      %p123 = scmp.ne.s32.totalorder %s115, %s117
      %p124 = scmp.eq.s32.totalorder %s23, 1
      %p125 = por %p123, %p124
      %p126 = scmp.ne.s32.totalorder %s117, %s118
      %p127 = scmp.eq.s32.totalorder %s23, 0
      %p128 = por %p126, %p127
      %p129 = scmp.ne.s32.totalorder %s117, %s118
      %p130 = scmp.eq.s32.totalorder %s24, 1
      %p131 = por %p129, %p130
      %p133 = scmp.ne.s32.totalorder %s118, %s132
      %p134 = scmp.eq.s32.totalorder %s24, 0
      %p135 = por %p133, %p134
      %s136 = ssub.s32 %s18, %s25
      %p137 = scmp.eq.s32.totalorder %s136, 0
      %s139 = sadd.s32 %s138, 1
      %s140 = scalar_select %p137, %s138, %s139
      %p143 = pneg %p137
      %p144 = scmp.eq.s32.totalorder %s18, 1
      %p145 = por %p143, %p144
      %p146 = scmp.ne.s32.totalorder %s138, %s141
      %p147 = scmp.eq.s32.totalorder %s18, 0
      %p148 = por %p146, %p147
      %p149 = scmp.ne.s32.totalorder %s138, %s141
      %p150 = scmp.eq.s32.totalorder %s23, 1
      %p151 = por %p149, %p150
      %p152 = scmp.ne.s32.totalorder %s141, %s142
      %p153 = scmp.eq.s32.totalorder %s23, 0
      %p154 = por %p152, %p153
      %p155 = scmp.ne.s32.totalorder %s141, %s142
      %p156 = scmp.eq.s32.totalorder %s24, 1
      %p157 = por %p155, %p156
      %p159 = scmp.ne.s32.totalorder %s142, %s158
      %p160 = scmp.eq.s32.totalorder %s24, 0
      %p161 = por %p159, %p160
      %p162 = scmp.le.s32.totalorder 1, %s18
      %p163 = scmp.lt.s32.totalorder %s18, 3
      %p164 = pnand %p162, %p163
      %p165 = pneg %p164
      // Predicated region
      $region9: #{tpu_custom_call.1} parent=5 // pred_check
        _
      $region10: #{tpu_custom_call.1} parent=5 // pred_check_branch
        %167 = sbr.rel (%p164) target = $region12
      $region11: #{tpu_custom_call.1} parent=5 // pred_region
        %s168 = ssub.s32 %s18, 1
        // Predicated region
        $region13: #{tpu_custom_call.1} parent=11 // pred_check
          %p169 = pneg %p65
        $region14: #{tpu_custom_call.1} parent=11 // pred_check_branch
          %171 = sbr.rel (%p169) target = $region16
        $region15: #{tpu_custom_call.1} parent=11 // pred_region
          %s173 = ssub.s32 512, 512
          %174 = vsyncadd [#allocation6], %s173
          %s175 = sshll.u32 [#allocation5], 4
          %s176 = int_to_ptr.vmem [resolvable:$true] %s175
          %181 = dma.hbm_to_vmem [thread:$0]  %s1, 512, %s176, [#allocation6], 256, 256, 16
        $region16: #{tpu_custom_call.1} parent=11 // pred_fallthru
          _
        // Predicated region
        $region17: #{tpu_custom_call.1} parent=11 // pred_check
          %p182 = pneg %p86
        $region18: #{tpu_custom_call.1} parent=11 // pred_check_branch
          %184 = sbr.rel (%p182) target = $region20
        $region19: #{tpu_custom_call.1} parent=11 // pred_region
          _
        $region20: #{tpu_custom_call.1} parent=11 // pred_fallthru
          _
        // Predicated region
        $region21: #{tpu_custom_call.1} parent=11 // pred_check
          %p185 = pneg %p107
        $region22: #{tpu_custom_call.1} parent=11 // pred_check_branch
          %187 = sbr.rel (%p185) target = $region24
        $region23: #{tpu_custom_call.1} parent=11 // pred_region
          %s189 = ssub.s32 28672, 28672
          %190 = vsyncadd [#allocation6], %s189
          %s191 = sshll.u32 [#allocation7], 4
          %s192 = int_to_ptr.vmem [resolvable:$true] %s191
          %197 = dma.hbm_to_vmem [thread:$0]  %s3, 28672, %s192, [#allocation6], 448, 448, 28
        $region24: #{tpu_custom_call.1} parent=11 // pred_fallthru
          _
        // Predicated region
        $region25: #{tpu_custom_call.1} parent=11 // pred_check
          %p198 = pneg %p128
        $region26: #{tpu_custom_call.1} parent=11 // pred_check_branch
          %200 = sbr.rel (%p198) target = $region28
        $region27: #{tpu_custom_call.1} parent=11 // pred_region
          _
        $region28: #{tpu_custom_call.1} parent=11 // pred_fallthru
          _
      $region12: #{tpu_custom_call.1} parent=5 // pred_fallthru
        _
      %p201 = scmp.lt.s32.totalorder %s18, 2
      // Predicated region
      $region29: #{tpu_custom_call.1} parent=5 // pred_check
        %p202 = pneg %p201
      $region30: #{tpu_custom_call.1} parent=5 // pred_check_branch
        %204 = sbr.rel (%p202) target = $region32
      $region31: #{tpu_custom_call.1} parent=5 // pred_region
        // Predicated region
        $region33: #{tpu_custom_call.1} parent=31 // pred_check
          %p205 = pneg %p38
        $region34: #{tpu_custom_call.1} parent=31 // pred_check_branch
          %207 = sbr.rel (%p205) target = $region36
        $region35: #{tpu_custom_call.1} parent=31 // pred_region
          %s208 = sand.u32 %s28, 1
          %s209 = scalar_lea.sflag [#allocation3], %s208
          %s210 = sand.u32 %s28, 1
          %s211 = smul.addr %s210, 4
          %s212 = scalar_lea.vmem [#allocation2], %s211
          %s214 = ssub.s32 64, 64
          %215 = vsyncadd %s209, %s214
          %s216 = smul.addr %s18, 64
          %s217 = scalar_lea.hbm %s0, %s216
          %s219 = sshll.u32 %s212, 4
          %s220 = int_to_ptr.vmem [resolvable:$true] %s219
          %222 = dma.hbm_to_vmem [thread:$0]  %s217, 64, %s220, %s209
        $region36: #{tpu_custom_call.1} parent=31 // pred_fallthru
          _
      $region32: #{tpu_custom_call.1} parent=5 // pred_fallthru
        _
      %p223 = scmp.le.s32.totalorder 1, %s18
      %p224 = scmp.lt.s32.totalorder %s18, 3
      %p225 = pnand %p223, %p224
      %p226 = pneg %p225
      // Predicated region
      $region37: #{tpu_custom_call.1} parent=5 // pred_check
        _
      $region38: #{tpu_custom_call.1} parent=5 // pred_check_branch
        %228 = sbr.rel (%p225) target = $region40
      $region39: #{tpu_custom_call.1} parent=5 // pred_region
        %s229 = ssub.s32 %s18, 1
        %s230 = sand.u32 %s31, 1
        %s231 = scalar_lea.sflag [#allocation3], %s230
        %s232 = sand.u32 %s31, 1
        %s233 = smul.addr %s232, 4
        %s234 = scalar_lea.vmem [#allocation2], %s233
        // Predicated region
        $region41: #{tpu_custom_call.1} parent=39 // pred_check
          %p235 = pneg %p44
        $region42: #{tpu_custom_call.1} parent=39 // pred_check_branch
          %237 = sbr.rel (%p235) target = $region44
        $region43: #{tpu_custom_call.1} parent=39 // pred_region
          %238 = dma.done %s231, 64
        $region44: #{tpu_custom_call.1} parent=39 // pred_fallthru
          _
        // Predicated region
        $region45: #{tpu_custom_call.1} parent=39 // pred_check
          %p239 = pneg %p65
        $region46: #{tpu_custom_call.1} parent=39 // pred_check_branch
          %241 = sbr.rel (%p239) target = $region48
        $region47: #{tpu_custom_call.1} parent=39 // pred_region
          %242 = dma.done [#allocation6], 512
        $region48: #{tpu_custom_call.1} parent=39 // pred_fallthru
          _
        // Predicated region
        $region49: #{tpu_custom_call.1} parent=39 // pred_check
          %p243 = pneg %p107
        $region50: #{tpu_custom_call.1} parent=39 // pred_check_branch
          %245 = sbr.rel (%p243) target = $region52
        $region51: #{tpu_custom_call.1} parent=39 // pred_region
          %246 = dma.done [#allocation6], 28672
        $region52: #{tpu_custom_call.1} parent=39 // pred_fallthru
          _
        %s247 = sand.u32 %s31, 1
        %s248 = scalar_lea.sflag [#allocation3], %s247
        %s249 = sand.u32 %s31, 1
        %s250 = smul.addr %s249, 4
        %s251 = scalar_lea.vmem [#allocation2], %s250
        %p252 = pneg %p44
        %p253 = pneg %p41
        %p254 = pneg %p65
        %p255 = pneg %p62
        %p256 = pneg %p86
        %p257 = pneg %p83
        %p258 = pneg %p107
        %p259 = pneg %p104
        %p260 = pneg %p128
        %p261 = pneg %p125
        %p262 = pneg %p154
        %p263 = pneg %p151
        %s264 = sand.u32 %s141, 1
        %s265 = scalar_lea.sflag [#allocation4], %s264
        %s266 = sand.u32 %s141, 1
        %s267 = smul.addr %s266, 56
        %s268 = scalar_lea.vmem [#allocation8], %s267
        %v270 = vld [vmem:[%s234] sm:$0xf]
        %v271 = vld [vmem:[#allocation5] sm:$0xff]
        %v272 = vld [vmem:[#allocation5 + $0x8] sm:$0xff]
        %v273 = vld [vmem:[#allocation5 + $0x10] sm:$0x11]
        %v274 = vld [vmem:[#allocation5 + $0x18] sm:$0x11]
        %v275 = vld [vmem:[%s2] sm:$0xf]
        %v277 = vlaneseq
        %v278 = vshrl.u32 %v277, 7
        %v279 = vsub.s32 0, %v278
        %v280 = vrot.slane %v275, %v279
        %v281 = vlaneseq
        %v282 = vshrl.u32 %v281, 7
        %v283 = vsub.s32 1, %v282
        %v284 = vrot.slane %v275, %v283
        %v285 = vlaneseq
        %v286 = vshrl.u32 %v285, 7
        %v287 = vsub.s32 2, %v286
        %v288 = vrot.slane %v275, %v287
        %v289 = vlaneseq
        %v290 = vshrl.u32 %v289, 7
        %v291 = vsub.s32 3, %v290
        %v292 = vrot.slane %v275, %v291
        %v301 = vunpack.c.l.b16 %v271
        %v302 = vunpack.c.h.b16 %v271
        %v303 = vunpack.c.l.b16 %v272
        %v304 = vunpack.c.h.b16 %v272
        %v305 = vunpack.c.l.b16 %v273
        %v306 = vunpack.c.h.b16 %v273
        %v307 = vunpack.c.l.b16 %v274
        %v308 = vunpack.c.h.b16 %v274
        %v309 = vpack.c.b16 %v305, %v301
        %v310 = vpack.c.b16 %v306, %v302
        %v311 = vpack.c.b16 %v307, %v303
        %v312 = vpack.c.b16 %v308, %v304
        %vm313 = vcmask 80896
        %v315 = vsel %vm313, %v270, 0
        %vm317 = vcmask 1044480
        %v319 = vsel %vm317, %v309, 0
        %v322 = vsel %vm317, %v310, 0
        %v325 = vsel %vm317, %v311, 0
        %v328 = vsel %vm317, %v312, 0
        %330 = vmatprep.subr.bf16.mxu0 %v322
        %331 = vmatpush1.bf16.msra.mxu0 %v319
        %332 = vmatprep.subr.bf16.mxu0 0
        %333 = vmatpush1.bf16.msra.mxu0 0
        %334 = vmatprep.subr.bf16.mxu0 0
        %335 = vmatpush1.bf16.msra.mxu0 0
        %336 = vmatprep.subr.bf16.mxu0 0
        %337 = vmatpush1.bf16.msra.mxu0 0
        %338 = vmatprep.subr.bf16.mxu0 0
        %339 = vmatpush1.bf16.msra.mxu0 0
        %340 = vmatprep.subr.bf16.mxu0 0
        %341 = vmatpush1.bf16.msra.mxu0 0
        %342 = vmatprep.subr.bf16.mxu0 0
        %343 = vmatpush1.bf16.msra.mxu0 0
        %344 = vmatprep.subr.bf16.mxu0 0
        %345 = vmatpush1.bf16.msra.mxu0 0
        %346 = vmatprep.subr.bf16.mxu0 0
        %347 = vmatpush1.bf16.msra.mxu0 0
        %348 = vmatprep.subr.bf16.mxu0 0
        %349 = vmatpush1.bf16.msra.mxu0 0
        %350 = vmatprep.subr.bf16.mxu0 0
        %351 = vmatpush1.bf16.msra.mxu0 0
        %352 = vmatprep.subr.bf16.mxu0 0
        %353 = vmatpush1.bf16.msra.mxu0 0
        %354 = vmatprep.subr.bf16.mxu0 0
        %355 = vmatpush1.bf16.msra.mxu0 0
        %356 = vmatprep.subr.bf16.mxu0 0
        %357 = vmatpush1.bf16.msra.mxu0 0
        %358 = vmatprep.subr.bf16.mxu0 0
        %359 = vmatpush1.bf16.msra.mxu0 0
        %360 = vmatprep.subr.bf16.mxu0 0
        %361 = vmatpush1.bf16.msra.mxu0 0
        %362 = vmatprep.mubr.bf16.mxu0 0
        %363 = vmatmul.mubr.bf16.gmra.mrb[0].mxu0 %v315
        %v364 = vpop.f32.mrb[0].mxu0
        %v365 = vadd.f32 %v280, %v364
        %v366 = vpop.f32.mrb[0].mxu0
        %v367 = vadd.f32 %v284, %v366
        %v368 = vpop.f32.mrb[0].mxu0
        %v369 = vpop.f32.mrb[0].mxu0
        %370 = vdwg.mxu0
        %371 = vmatprep.subr.bf16.mxu0 %v328
        %372 = vmatpush1.bf16.msra.mxu0 %v325
        %373 = vmatprep.subr.bf16.mxu0 0
        %374 = vmatpush1.bf16.msra.mxu0 0
        %375 = vmatprep.subr.bf16.mxu0 0
        %376 = vmatpush1.bf16.msra.mxu0 0
        %377 = vmatprep.subr.bf16.mxu0 0
        %378 = vmatpush1.bf16.msra.mxu0 0
        %379 = vmatprep.subr.bf16.mxu0 0
        %380 = vmatpush1.bf16.msra.mxu0 0
        %381 = vmatprep.subr.bf16.mxu0 0
        %382 = vmatpush1.bf16.msra.mxu0 0
        %383 = vmatprep.subr.bf16.mxu0 0
        %384 = vmatpush1.bf16.msra.mxu0 0
        %385 = vmatprep.subr.bf16.mxu0 0
        %386 = vmatpush1.bf16.msra.mxu0 0
        %387 = vmatprep.subr.bf16.mxu0 0
        %388 = vmatpush1.bf16.msra.mxu0 0
        %389 = vmatprep.subr.bf16.mxu0 0
        %390 = vmatpush1.bf16.msra.mxu0 0
        %391 = vmatprep.subr.bf16.mxu0 0
        %392 = vmatpush1.bf16.msra.mxu0 0
        %393 = vmatprep.subr.bf16.mxu0 0
        %394 = vmatpush1.bf16.msra.mxu0 0
        %395 = vmatprep.subr.bf16.mxu0 0
        %396 = vmatpush1.bf16.msra.mxu0 0
        %397 = vmatprep.subr.bf16.mxu0 0
        %398 = vmatpush1.bf16.msra.mxu0 0
        %399 = vmatprep.subr.bf16.mxu0 0
        %400 = vmatpush1.bf16.msra.mxu0 0
        %401 = vmatprep.subr.bf16.mxu0 0
        %402 = vmatpush1.bf16.msra.mxu0 0
        %403 = vmatprep.mubr.bf16.mxu0 0
        %404 = vmatmul.mubr.bf16.gmra.mrb[0].mxu0 %v315
        %v405 = vpop.f32.mrb[0].mxu0
        %v406 = vadd.f32 %v288, %v405
        %v407 = vpop.f32.mrb[0].mxu0
        %v408 = vadd.f32 %v292, %v407
        %v409 = vpop.f32.mrb[0].mxu0
        %v410 = vpop.f32.mrb[0].mxu0
        %411 = vdwg.mxu0
        %v412 = vmax.f32 %v365, 0.0
        %v413 = vmax.f32 %v367, 0.0
        %v414 = vmax.f32 %v406, 0.0
        %v415 = vmax.f32 %v408, 0.0
        %v416 = vpack.c.bf16 %v412, %v412
        %v417 = vpack.c.bf16 %v413, %v413
        %v418 = vpack.c.bf16 %v414, %v414
        %v419 = vpack.c.bf16 %v415, %v415
        %v420 = vld [vmem:[#allocation7] sm:$0xff]
        %v421 = vld [vmem:[#allocation7 + $0x8] sm:$0xff]
        %v422 = vld [vmem:[#allocation7 + $0x10] sm:$0xff]
        %v423 = vld [vmem:[#allocation7 + $0x18] sm:$0xf]
        %v424 = vld [vmem:[#allocation7 + $0x1c] sm:$0xff]
        %v425 = vld [vmem:[#allocation7 + $0x24] sm:$0xff]
        %v426 = vld [vmem:[#allocation7 + $0x2c] sm:$0xff]
        %v427 = vld [vmem:[#allocation7 + $0x34] sm:$0xf]
        %v428 = vld [vmem:[#allocation7 + $0x38] sm:$0xff]
        %v429 = vld [vmem:[#allocation7 + $0x40] sm:$0xff]
        %v430 = vld [vmem:[#allocation7 + $0x48] sm:$0xff]
        %v431 = vld [vmem:[#allocation7 + $0x50] sm:$0xf]
        %v432 = vld [vmem:[#allocation7 + $0x54] sm:$0xff]
        %v433 = vld [vmem:[#allocation7 + $0x5c] sm:$0xff]
        %v434 = vld [vmem:[#allocation7 + $0x64] sm:$0xff]
        %v435 = vld [vmem:[#allocation7 + $0x6c] sm:$0xf]
        %v436 = vld [vmem:[#allocation7 + $0x70] sm:$0xff]
        %v437 = vld [vmem:[#allocation7 + $0x78] sm:$0xff]
        %v438 = vld [vmem:[#allocation7 + $0x80] sm:$0xff]
        %v439 = vld [vmem:[#allocation7 + $0x88] sm:$0xf]
        %v440 = vld [vmem:[#allocation7 + $0x8c] sm:$0xff]
        %v441 = vld [vmem:[#allocation7 + $0x94] sm:$0xff]
        %v442 = vld [vmem:[#allocation7 + $0x9c] sm:$0xff]
        %v443 = vld [vmem:[#allocation7 + $0xa4] sm:$0xf]
        %v444 = vld [vmem:[#allocation7 + $0xa8] sm:$0xff]
        %v445 = vld [vmem:[#allocation7 + $0xb0] sm:$0xff]
        %v446 = vld [vmem:[#allocation7 + $0xb8] sm:$0xff]
        %v447 = vld [vmem:[#allocation7 + $0xc0] sm:$0xf]
        %v448 = vld [vmem:[#allocation7 + $0xc4] sm:$0xff]
        %v449 = vld [vmem:[#allocation7 + $0xcc] sm:$0xff]
        %v450 = vld [vmem:[#allocation7 + $0xd4] sm:$0xff]
        %v451 = vld [vmem:[#allocation7 + $0xdc] sm:$0xf]
        %v452 = vld [vmem:[#allocation7 + $0xe0] sm:$0xff]
        %v453 = vld [vmem:[#allocation7 + $0xe8] sm:$0xff]
        %v454 = vld [vmem:[#allocation7 + $0xf0] sm:$0xff]
        %v455 = vld [vmem:[#allocation7 + $0xf8] sm:$0xf]
        %v456 = vld [vmem:[#allocation7 + $0xfc] sm:$0xff]
        %v457 = vld [vmem:[#allocation7 + $0x104] sm:$0xff]
        %v458 = vld [vmem:[#allocation7 + $0x10c] sm:$0xff]
        %v459 = vld [vmem:[#allocation7 + $0x114] sm:$0xf]
        %v460 = vld [vmem:[#allocation7 + $0x118] sm:$0xff]
        %v461 = vld [vmem:[#allocation7 + $0x120] sm:$0xff]
        %v462 = vld [vmem:[#allocation7 + $0x128] sm:$0xff]
        %v463 = vld [vmem:[#allocation7 + $0x130] sm:$0xf]
        %v464 = vld [vmem:[#allocation7 + $0x134] sm:$0xff]
        %v465 = vld [vmem:[#allocation7 + $0x13c] sm:$0xff]
        %v466 = vld [vmem:[#allocation7 + $0x144] sm:$0xff]
        %v467 = vld [vmem:[#allocation7 + $0x14c] sm:$0xf]
        %v468 = vld [vmem:[#allocation7 + $0x150] sm:$0xff]
        %v469 = vld [vmem:[#allocation7 + $0x158] sm:$0xff]
        %v470 = vld [vmem:[#allocation7 + $0x160] sm:$0xff]
        %v471 = vld [vmem:[#allocation7 + $0x168] sm:$0xf]
        %v472 = vld [vmem:[#allocation7 + $0x16c] sm:$0xff]
        %v473 = vld [vmem:[#allocation7 + $0x174] sm:$0xff]
        %v474 = vld [vmem:[#allocation7 + $0x17c] sm:$0xff]
        %v475 = vld [vmem:[#allocation7 + $0x184] sm:$0xf]
        %v476 = vld [vmem:[#allocation7 + $0x188] sm:$0xff]
        %v477 = vld [vmem:[#allocation7 + $0x190] sm:$0xff]
        %v478 = vld [vmem:[#allocation7 + $0x198] sm:$0xff]
        %v479 = vld [vmem:[#allocation7 + $0x1a0] sm:$0xf]
        %v480 = vld [vmem:[#allocation7 + $0x1a4] sm:$0xff]
        %v481 = vld [vmem:[#allocation7 + $0x1ac] sm:$0xff]
        %v482 = vld [vmem:[#allocation7 + $0x1b4] sm:$0xff]
        %v483 = vld [vmem:[#allocation7 + $0x1bc] sm:$0xf]
        %v484 = vld [vmem:[#allocation7 + $0x1c0] sm:$0xff]
        %v485 = vld [vmem:[#allocation7 + $0x1c8] sm:$0xff]
        %v486 = vld [vmem:[#allocation7 + $0x1d0] sm:$0xff]
        %v487 = vld [vmem:[#allocation7 + $0x1d8] sm:$0xf]
        %v488 = vld [vmem:[#allocation7 + $0x1dc] sm:$0xff]
        %v489 = vld [vmem:[#allocation7 + $0x1e4] sm:$0xff]
        %v490 = vld [vmem:[#allocation7 + $0x1ec] sm:$0xff]
        %v491 = vld [vmem:[#allocation7 + $0x1f4] sm:$0xf]
        %v492 = vld [vmem:[#allocation7 + $0x1f8] sm:$0xff]
        %v493 = vld [vmem:[#allocation7 + $0x200] sm:$0xff]
        %v494 = vld [vmem:[#allocation7 + $0x208] sm:$0xff]
        %v495 = vld [vmem:[#allocation7 + $0x210] sm:$0xf]
        %v496 = vld [vmem:[#allocation7 + $0x214] sm:$0xff]
        %v497 = vld [vmem:[#allocation7 + $0x21c] sm:$0xff]
        %v498 = vld [vmem:[#allocation7 + $0x224] sm:$0xff]
        %v499 = vld [vmem:[#allocation7 + $0x22c] sm:$0xf]
        %v500 = vld [vmem:[#allocation7 + $0x230] sm:$0xff]
        %v501 = vld [vmem:[#allocation7 + $0x238] sm:$0xff]
        %v502 = vld [vmem:[#allocation7 + $0x240] sm:$0xff]
        %v503 = vld [vmem:[#allocation7 + $0x248] sm:$0xf]
        %v504 = vld [vmem:[#allocation7 + $0x24c] sm:$0xff]
        %v505 = vld [vmem:[#allocation7 + $0x254] sm:$0xff]
        %v506 = vld [vmem:[#allocation7 + $0x25c] sm:$0xff]
        %v507 = vld [vmem:[#allocation7 + $0x264] sm:$0xf]
        %v508 = vld [vmem:[#allocation7 + $0x268] sm:$0xff]
        %v509 = vld [vmem:[#allocation7 + $0x270] sm:$0xff]
        %v510 = vld [vmem:[#allocation7 + $0x278] sm:$0xff]
        %v511 = vld [vmem:[#allocation7 + $0x280] sm:$0xf]
        %v512 = vld [vmem:[#allocation7 + $0x284] sm:$0xff]
        %v513 = vld [vmem:[#allocation7 + $0x28c] sm:$0xff]
        %v514 = vld [vmem:[#allocation7 + $0x294] sm:$0xff]
        %v515 = vld [vmem:[#allocation7 + $0x29c] sm:$0xf]
        %v516 = vld [vmem:[#allocation7 + $0x2a0] sm:$0xff]
        %v517 = vld [vmem:[#allocation7 + $0x2a8] sm:$0xff]
        %v518 = vld [vmem:[#allocation7 + $0x2b0] sm:$0xff]
        %v519 = vld [vmem:[#allocation7 + $0x2b8] sm:$0xf]
        %v520 = vld [vmem:[#allocation7 + $0x2bc] sm:$0xff]
        %v521 = vld [vmem:[#allocation7 + $0x2c4] sm:$0xff]
        %v522 = vld [vmem:[#allocation7 + $0x2cc] sm:$0xff]
        %v523 = vld [vmem:[#allocation7 + $0x2d4] sm:$0xf]
        %v524 = vld [vmem:[#allocation7 + $0x2d8] sm:$0xff]
        %v525 = vld [vmem:[#allocation7 + $0x2e0] sm:$0xff]
        %v526 = vld [vmem:[#allocation7 + $0x2e8] sm:$0xff]
        %v527 = vld [vmem:[#allocation7 + $0x2f0] sm:$0xf]
        %v528 = vld [vmem:[#allocation7 + $0x2f4] sm:$0xff]
        %v529 = vld [vmem:[#allocation7 + $0x2fc] sm:$0xff]
        %v530 = vld [vmem:[#allocation7 + $0x304] sm:$0xff]
        %v531 = vld [vmem:[#allocation7 + $0x30c] sm:$0xf]
        %v532 = vld [vmem:[#allocation7 + $0x310] sm:$0xff]
        %v533 = vld [vmem:[#allocation7 + $0x318] sm:$0xff]
        %v534 = vld [vmem:[#allocation7 + $0x320] sm:$0xff]
        %v535 = vld [vmem:[#allocation7 + $0x328] sm:$0xf]
        %v536 = vld [vmem:[#allocation7 + $0x32c] sm:$0xff]
        %v537 = vld [vmem:[#allocation7 + $0x334] sm:$0xff]
        %v538 = vld [vmem:[#allocation7 + $0x33c] sm:$0xff]
        %v539 = vld [vmem:[#allocation7 + $0x344] sm:$0xf]
        %v540 = vld [vmem:[#allocation7 + $0x348] sm:$0xff]
        %v541 = vld [vmem:[#allocation7 + $0x350] sm:$0xff]
        %v542 = vld [vmem:[#allocation7 + $0x358] sm:$0xff]
        %v543 = vld [vmem:[#allocation7 + $0x360] sm:$0xf]
        %v544 = vld [vmem:[#allocation7 + $0x364] sm:$0xff]
        %v545 = vld [vmem:[#allocation7 + $0x36c] sm:$0xff]
        %v546 = vld [vmem:[#allocation7 + $0x374] sm:$0xff]
        %v547 = vld [vmem:[#allocation7 + $0x37c] sm:$0xf]
        %v548 = vld [vmem:[#allocation7 + $0x380] sm:$0xff]
        %v549 = vld [vmem:[#allocation7 + $0x388] sm:$0xff]
        %v550 = vld [vmem:[#allocation7 + $0x390] sm:$0xff]
        %v551 = vld [vmem:[#allocation7 + $0x398] sm:$0xf]
        %v552 = vld [vmem:[#allocation7 + $0x39c] sm:$0xff]
        %v553 = vld [vmem:[#allocation7 + $0x3a4] sm:$0xff]
        %v554 = vld [vmem:[#allocation7 + $0x3ac] sm:$0xff]
        %v555 = vld [vmem:[#allocation7 + $0x3b4] sm:$0xf]
        %v556 = vld [vmem:[#allocation7 + $0x3b8] sm:$0xff]
        %v557 = vld [vmem:[#allocation7 + $0x3c0] sm:$0xff]
        %v558 = vld [vmem:[#allocation7 + $0x3c8] sm:$0xff]
        %v559 = vld [vmem:[#allocation7 + $0x3d0] sm:$0xf]
        %v560 = vld [vmem:[#allocation7 + $0x3d4] sm:$0xff]
        %v561 = vld [vmem:[#allocation7 + $0x3dc] sm:$0xff]
        %v562 = vld [vmem:[#allocation7 + $0x3e4] sm:$0xff]
        %v563 = vld [vmem:[#allocation7 + $0x3ec] sm:$0xf]
        %v564 = vld [vmem:[#allocation7 + $0x3f0] sm:$0xff]
        %v565 = vld [vmem:[#allocation7 + $0x3f8] sm:$0xff]
        %v566 = vld [vmem:[#allocation7 + $0x400] sm:$0xff]
        %v567 = vld [vmem:[#allocation7 + $0x408] sm:$0xf]
        %v568 = vld [vmem:[#allocation7 + $0x40c] sm:$0xff]
        %v569 = vld [vmem:[#allocation7 + $0x414] sm:$0xff]
        %v570 = vld [vmem:[#allocation7 + $0x41c] sm:$0xff]
        %v571 = vld [vmem:[#allocation7 + $0x424] sm:$0xf]
        %v572 = vld [vmem:[#allocation7 + $0x428] sm:$0xff]
        %v573 = vld [vmem:[#allocation7 + $0x430] sm:$0xff]
        %v574 = vld [vmem:[#allocation7 + $0x438] sm:$0xff]
        %v575 = vld [vmem:[#allocation7 + $0x440] sm:$0xf]
        %v576 = vld [vmem:[#allocation7 + $0x444] sm:$0xff]
        %v577 = vld [vmem:[#allocation7 + $0x44c] sm:$0xff]
        %v578 = vld [vmem:[#allocation7 + $0x454] sm:$0xff]
        %v579 = vld [vmem:[#allocation7 + $0x45c] sm:$0xf]
        %v580 = vld [vmem:[#allocation7 + $0x460] sm:$0xff]
        %v581 = vld [vmem:[#allocation7 + $0x468] sm:$0xff]
        %v582 = vld [vmem:[#allocation7 + $0x470] sm:$0xff]
        %v583 = vld [vmem:[#allocation7 + $0x478] sm:$0xf]
        %v584 = vld [vmem:[#allocation7 + $0x47c] sm:$0xff]
        %v585 = vld [vmem:[#allocation7 + $0x484] sm:$0xff]
        %v586 = vld [vmem:[#allocation7 + $0x48c] sm:$0xff]
        %v587 = vld [vmem:[#allocation7 + $0x494] sm:$0xf]
        %v588 = vld [vmem:[#allocation7 + $0x498] sm:$0xff]
        %v589 = vld [vmem:[#allocation7 + $0x4a0] sm:$0xff]
        %v590 = vld [vmem:[#allocation7 + $0x4a8] sm:$0xff]
        %v591 = vld [vmem:[#allocation7 + $0x4b0] sm:$0xf]
        %v592 = vld [vmem:[#allocation7 + $0x4b4] sm:$0xff]
        %v593 = vld [vmem:[#allocation7 + $0x4bc] sm:$0xff]
        %v594 = vld [vmem:[#allocation7 + $0x4c4] sm:$0xff]
        %v595 = vld [vmem:[#allocation7 + $0x4cc] sm:$0xf]
        %v596 = vld [vmem:[#allocation7 + $0x4d0] sm:$0xff]
        %v597 = vld [vmem:[#allocation7 + $0x4d8] sm:$0xff]
        %v598 = vld [vmem:[#allocation7 + $0x4e0] sm:$0xff]
        %v599 = vld [vmem:[#allocation7 + $0x4e8] sm:$0xf]
        %v600 = vld [vmem:[#allocation7 + $0x4ec] sm:$0xff]
        %v601 = vld [vmem:[#allocation7 + $0x4f4] sm:$0xff]
        %v602 = vld [vmem:[#allocation7 + $0x4fc] sm:$0xff]
        %v603 = vld [vmem:[#allocation7 + $0x504] sm:$0xf]
        %v604 = vld [vmem:[#allocation7 + $0x508] sm:$0xff]
        %v605 = vld [vmem:[#allocation7 + $0x510] sm:$0xff]
        %v606 = vld [vmem:[#allocation7 + $0x518] sm:$0xff]
        %v607 = vld [vmem:[#allocation7 + $0x520] sm:$0xf]
        %v608 = vld [vmem:[#allocation7 + $0x524] sm:$0xff]
        %v609 = vld [vmem:[#allocation7 + $0x52c] sm:$0xff]
        %v610 = vld [vmem:[#allocation7 + $0x534] sm:$0xff]
        %v611 = vld [vmem:[#allocation7 + $0x53c] sm:$0xf]
        %v612 = vld [vmem:[#allocation7 + $0x540] sm:$0xff]
        %v613 = vld [vmem:[#allocation7 + $0x548] sm:$0xff]
        %v614 = vld [vmem:[#allocation7 + $0x550] sm:$0xff]
        %v615 = vld [vmem:[#allocation7 + $0x558] sm:$0xf]
        %v616 = vld [vmem:[#allocation7 + $0x55c] sm:$0xff]
        %v617 = vld [vmem:[#allocation7 + $0x564] sm:$0xff]
        %v618 = vld [vmem:[#allocation7 + $0x56c] sm:$0xff]
        %v619 = vld [vmem:[#allocation7 + $0x574] sm:$0xf]
        %v620 = vld [vmem:[#allocation7 + $0x578] sm:$0xff]
        %v621 = vld [vmem:[#allocation7 + $0x580] sm:$0xff]
        %v622 = vld [vmem:[#allocation7 + $0x588] sm:$0xff]
        %v623 = vld [vmem:[#allocation7 + $0x590] sm:$0xf]
        %v624 = vld [vmem:[#allocation7 + $0x594] sm:$0xff]
        %v625 = vld [vmem:[#allocation7 + $0x59c] sm:$0xff]
        %v626 = vld [vmem:[#allocation7 + $0x5a4] sm:$0xff]
        %v627 = vld [vmem:[#allocation7 + $0x5ac] sm:$0xf]
        %v628 = vld [vmem:[#allocation7 + $0x5b0] sm:$0xff]
        %v629 = vld [vmem:[#allocation7 + $0x5b8] sm:$0xff]
        %v630 = vld [vmem:[#allocation7 + $0x5c0] sm:$0xff]
        %v631 = vld [vmem:[#allocation7 + $0x5c8] sm:$0xf]
        %v632 = vld [vmem:[#allocation7 + $0x5cc] sm:$0xff]
        %v633 = vld [vmem:[#allocation7 + $0x5d4] sm:$0xff]
        %v634 = vld [vmem:[#allocation7 + $0x5dc] sm:$0xff]
        %v635 = vld [vmem:[#allocation7 + $0x5e4] sm:$0xf]
        %v636 = vld [vmem:[#allocation7 + $0x5e8] sm:$0xff]
        %v637 = vld [vmem:[#allocation7 + $0x5f0] sm:$0xff]
        %v638 = vld [vmem:[#allocation7 + $0x5f8] sm:$0xff]
        %v639 = vld [vmem:[#allocation7 + $0x600] sm:$0xf]
        %v640 = vld [vmem:[#allocation7 + $0x604] sm:$0xff]
        %v641 = vld [vmem:[#allocation7 + $0x60c] sm:$0xff]
        %v642 = vld [vmem:[#allocation7 + $0x614] sm:$0xff]
        %v643 = vld [vmem:[#allocation7 + $0x61c] sm:$0xf]
        %v644 = vld [vmem:[#allocation7 + $0x620] sm:$0xff]
        %v645 = vld [vmem:[#allocation7 + $0x628] sm:$0xff]
        %v646 = vld [vmem:[#allocation7 + $0x630] sm:$0xff]
        %v647 = vld [vmem:[#allocation7 + $0x638] sm:$0xf]
        %v648 = vld [vmem:[#allocation7 + $0x63c] sm:$0xff]
        %v649 = vld [vmem:[#allocation7 + $0x644] sm:$0xff]
        %v650 = vld [vmem:[#allocation7 + $0x64c] sm:$0xff]
        %v651 = vld [vmem:[#allocation7 + $0x654] sm:$0xf]
        %v652 = vld [vmem:[#allocation7 + $0x658] sm:$0xff]
        %v653 = vld [vmem:[#allocation7 + $0x660] sm:$0xff]
        %v654 = vld [vmem:[#allocation7 + $0x668] sm:$0xff]
        %v655 = vld [vmem:[#allocation7 + $0x670] sm:$0xf]
        %v656 = vld [vmem:[#allocation7 + $0x674] sm:$0xff]
        %v657 = vld [vmem:[#allocation7 + $0x67c] sm:$0xff]
        %v658 = vld [vmem:[#allocation7 + $0x684] sm:$0xff]
        %v659 = vld [vmem:[#allocation7 + $0x68c] sm:$0xf]
        %v660 = vld [vmem:[#allocation7 + $0x690] sm:$0xff]
        %v661 = vld [vmem:[#allocation7 + $0x698] sm:$0xff]
        %v662 = vld [vmem:[#allocation7 + $0x6a0] sm:$0xff]
        %v663 = vld [vmem:[#allocation7 + $0x6a8] sm:$0xf]
        %v664 = vld [vmem:[#allocation7 + $0x6ac] sm:$0xff]
        %v665 = vld [vmem:[#allocation7 + $0x6b4] sm:$0xff]
        %v666 = vld [vmem:[#allocation7 + $0x6bc] sm:$0xff]
        %v667 = vld [vmem:[#allocation7 + $0x6c4] sm:$0xf]
        %v668 = vld [vmem:[#allocation7 + $0x6c8] sm:$0xff]
        %v669 = vld [vmem:[#allocation7 + $0x6d0] sm:$0xff]
        %v670 = vld [vmem:[#allocation7 + $0x6d8] sm:$0xff]
        %v671 = vld [vmem:[#allocation7 + $0x6e0] sm:$0xf]
        %v672 = vld [vmem:[#allocation7 + $0x6e4] sm:$0xff]
        %v673 = vld [vmem:[#allocation7 + $0x6ec] sm:$0xff]
        %v674 = vld [vmem:[#allocation7 + $0x6f4] sm:$0xff]
        %v675 = vld [vmem:[#allocation7 + $0x6fc] sm:$0xf]
        %v676 = vld [vmem:[%s4] sm:$0xff]
        %v678 = vlaneseq
        %v679 = vshrl.u32 %v678, 7
        %v680 = vsub.s32 0, %v679
        %v681 = vrot.slane %v676, %v680
        %v682 = vlaneseq
        %v683 = vshrl.u32 %v682, 7
        %v684 = vsub.s32 1, %v683
        %v685 = vrot.slane %v676, %v684
        %v686 = vlaneseq
        %v687 = vshrl.u32 %v686, 7
        %v688 = vsub.s32 2, %v687
        %v689 = vrot.slane %v676, %v688
        %v690 = vlaneseq
        %v691 = vshrl.u32 %v690, 7
        %v692 = vsub.s32 3, %v691
        %v693 = vrot.slane %v676, %v692
        %v694 = vlaneseq
        %v695 = vshrl.u32 %v694, 7
        %v696 = vsub.s32 4, %v695
        %v697 = vrot.slane %v676, %v696
        %v698 = vlaneseq
        %v699 = vshrl.u32 %v698, 7
        %v700 = vsub.s32 5, %v699
        %v701 = vrot.slane %v676, %v700
        %v702 = vlaneseq
        %v703 = vshrl.u32 %v702, 7
        %v704 = vsub.s32 6, %v703
        %v705 = vrot.slane %v676, %v704
        %v969 = vunpack.c.l.b16 %v420
        %v970 = vunpack.c.h.b16 %v420
        %v971 = vunpack.c.l.b16 %v421
        %v972 = vunpack.c.h.b16 %v421
        %v973 = vunpack.c.l.b16 %v422
        %v974 = vunpack.c.h.b16 %v422
        %v975 = vunpack.c.l.b16 %v423
        %v976 = vunpack.c.l.b16 %v424
        %v977 = vunpack.c.h.b16 %v424
        %v978 = vunpack.c.l.b16 %v425
        %v979 = vunpack.c.h.b16 %v425
        %v980 = vunpack.c.l.b16 %v426
        %v981 = vunpack.c.h.b16 %v426
        %v982 = vunpack.c.l.b16 %v427
        %v983 = vunpack.c.l.b16 %v428
        %v984 = vunpack.c.h.b16 %v428
        %v985 = vunpack.c.l.b16 %v429
        %v986 = vunpack.c.h.b16 %v429
        %v987 = vunpack.c.l.b16 %v430
        %v988 = vunpack.c.h.b16 %v430
        %v989 = vunpack.c.l.b16 %v431
        %v990 = vunpack.c.l.b16 %v432
        %v991 = vunpack.c.h.b16 %v432
        %v992 = vunpack.c.l.b16 %v433
        %v993 = vunpack.c.h.b16 %v433
        %v994 = vunpack.c.l.b16 %v434
        %v995 = vunpack.c.h.b16 %v434
        %v996 = vunpack.c.l.b16 %v435
        %v997 = vunpack.c.l.b16 %v436
        %v998 = vunpack.c.h.b16 %v436
        %v999 = vunpack.c.l.b16 %v437
        %v1000 = vunpack.c.h.b16 %v437
        %v1001 = vunpack.c.l.b16 %v438
        %v1002 = vunpack.c.h.b16 %v438
        %v1003 = vunpack.c.l.b16 %v439
        %v1004 = vunpack.c.l.b16 %v440
        %v1005 = vunpack.c.h.b16 %v440
        %v1006 = vunpack.c.l.b16 %v441
        %v1007 = vunpack.c.h.b16 %v441
        %v1008 = vunpack.c.l.b16 %v442
        %v1009 = vunpack.c.h.b16 %v442
        %v1010 = vunpack.c.l.b16 %v443
        %v1011 = vunpack.c.l.b16 %v444
        %v1012 = vunpack.c.h.b16 %v444
        %v1013 = vunpack.c.l.b16 %v445
        %v1014 = vunpack.c.h.b16 %v445
        %v1015 = vunpack.c.l.b16 %v446
        %v1016 = vunpack.c.h.b16 %v446
        %v1017 = vunpack.c.l.b16 %v447
        %v1018 = vunpack.c.l.b16 %v448
        %v1019 = vunpack.c.h.b16 %v448
        %v1020 = vunpack.c.l.b16 %v449
        %v1021 = vunpack.c.h.b16 %v449
        %v1022 = vunpack.c.l.b16 %v450
        %v1023 = vunpack.c.h.b16 %v450
        %v1024 = vunpack.c.l.b16 %v451
        %v1025 = vunpack.c.l.b16 %v452
        %v1026 = vunpack.c.h.b16 %v452
        %v1027 = vunpack.c.l.b16 %v453
        %v1028 = vunpack.c.h.b16 %v453
        %v1029 = vunpack.c.l.b16 %v454
        %v1030 = vunpack.c.h.b16 %v454
        %v1031 = vunpack.c.l.b16 %v455
        %v1032 = vunpack.c.l.b16 %v456
        %v1033 = vunpack.c.h.b16 %v456
        %v1034 = vunpack.c.l.b16 %v457
        %v1035 = vunpack.c.h.b16 %v457
        %v1036 = vunpack.c.l.b16 %v458
        %v1037 = vunpack.c.h.b16 %v458
        %v1038 = vunpack.c.l.b16 %v459
        %v1039 = vunpack.c.l.b16 %v460
        %v1040 = vunpack.c.h.b16 %v460
        %v1041 = vunpack.c.l.b16 %v461
        %v1042 = vunpack.c.h.b16 %v461
        %v1043 = vunpack.c.l.b16 %v462
        %v1044 = vunpack.c.h.b16 %v462
        %v1045 = vunpack.c.l.b16 %v463
        %v1046 = vunpack.c.l.b16 %v464
        %v1047 = vunpack.c.h.b16 %v464
        %v1048 = vunpack.c.l.b16 %v465
        %v1049 = vunpack.c.h.b16 %v465
        %v1050 = vunpack.c.l.b16 %v466
        %v1051 = vunpack.c.h.b16 %v466
        %v1052 = vunpack.c.l.b16 %v467
        %v1053 = vunpack.c.l.b16 %v468
        %v1054 = vunpack.c.h.b16 %v468
        %v1055 = vunpack.c.l.b16 %v469
        %v1056 = vunpack.c.h.b16 %v469
        %v1057 = vunpack.c.l.b16 %v470
        %v1058 = vunpack.c.h.b16 %v470
        %v1059 = vunpack.c.l.b16 %v471
        %v1060 = vunpack.c.l.b16 %v472
        %v1061 = vunpack.c.h.b16 %v472
        %v1062 = vunpack.c.l.b16 %v473
        %v1063 = vunpack.c.h.b16 %v473
        %v1064 = vunpack.c.l.b16 %v474
        %v1065 = vunpack.c.h.b16 %v474
        %v1066 = vunpack.c.l.b16 %v475
        %v1067 = vunpack.c.l.b16 %v476
        %v1068 = vunpack.c.h.b16 %v476
        %v1069 = vunpack.c.l.b16 %v477
        %v1070 = vunpack.c.h.b16 %v477
        %v1071 = vunpack.c.l.b16 %v478
        %v1072 = vunpack.c.h.b16 %v478
        %v1073 = vunpack.c.l.b16 %v479
        %v1074 = vunpack.c.l.b16 %v480
        %v1075 = vunpack.c.h.b16 %v480
        %v1076 = vunpack.c.l.b16 %v481
        %v1077 = vunpack.c.h.b16 %v481
        %v1078 = vunpack.c.l.b16 %v482
        %v1079 = vunpack.c.h.b16 %v482
        %v1080 = vunpack.c.l.b16 %v483
        %v1081 = vunpack.c.l.b16 %v484
        %v1082 = vunpack.c.h.b16 %v484
        %v1083 = vunpack.c.l.b16 %v485
        %v1084 = vunpack.c.h.b16 %v485
        %v1085 = vunpack.c.l.b16 %v486
        %v1086 = vunpack.c.h.b16 %v486
        %v1087 = vunpack.c.l.b16 %v487
        %v1088 = vunpack.c.l.b16 %v488
        %v1089 = vunpack.c.h.b16 %v488
        %v1090 = vunpack.c.l.b16 %v489
        %v1091 = vunpack.c.h.b16 %v489
        %v1092 = vunpack.c.l.b16 %v490
        %v1093 = vunpack.c.h.b16 %v490
        %v1094 = vunpack.c.l.b16 %v491
        %v1095 = vunpack.c.l.b16 %v492
        %v1096 = vunpack.c.h.b16 %v492
        %v1097 = vunpack.c.l.b16 %v493
        %v1098 = vunpack.c.h.b16 %v493
        %v1099 = vunpack.c.l.b16 %v494
        %v1100 = vunpack.c.h.b16 %v494
        %v1101 = vunpack.c.l.b16 %v495
        %v1102 = vunpack.c.l.b16 %v496
        %v1103 = vunpack.c.h.b16 %v496
        %v1104 = vunpack.c.l.b16 %v497
        %v1105 = vunpack.c.h.b16 %v497
        %v1106 = vunpack.c.l.b16 %v498
        %v1107 = vunpack.c.h.b16 %v498
        %v1108 = vunpack.c.l.b16 %v499
        %v1109 = vunpack.c.l.b16 %v500
        %v1110 = vunpack.c.h.b16 %v500
        %v1111 = vunpack.c.l.b16 %v501
        %v1112 = vunpack.c.h.b16 %v501
        %v1113 = vunpack.c.l.b16 %v502
        %v1114 = vunpack.c.h.b16 %v502
        %v1115 = vunpack.c.l.b16 %v503
        %v1116 = vunpack.c.l.b16 %v504
        %v1117 = vunpack.c.h.b16 %v504
        %v1118 = vunpack.c.l.b16 %v505
        %v1119 = vunpack.c.h.b16 %v505
        %v1120 = vunpack.c.l.b16 %v506
        %v1121 = vunpack.c.h.b16 %v506
        %v1122 = vunpack.c.l.b16 %v507
        %v1123 = vunpack.c.l.b16 %v508
        %v1124 = vunpack.c.h.b16 %v508
        %v1125 = vunpack.c.l.b16 %v509
        %v1126 = vunpack.c.h.b16 %v509
        %v1127 = vunpack.c.l.b16 %v510
        %v1128 = vunpack.c.h.b16 %v510
        %v1129 = vunpack.c.l.b16 %v511
        %v1130 = vunpack.c.l.b16 %v512
        %v1131 = vunpack.c.h.b16 %v512
        %v1132 = vunpack.c.l.b16 %v513
        %v1133 = vunpack.c.h.b16 %v513
        %v1134 = vunpack.c.l.b16 %v514
        %v1135 = vunpack.c.h.b16 %v514
        %v1136 = vunpack.c.l.b16 %v515
        %v1137 = vunpack.c.l.b16 %v516
        %v1138 = vunpack.c.h.b16 %v516
        %v1139 = vunpack.c.l.b16 %v517
        %v1140 = vunpack.c.h.b16 %v517
        %v1141 = vunpack.c.l.b16 %v518
        %v1142 = vunpack.c.h.b16 %v518
        %v1143 = vunpack.c.l.b16 %v519
        %v1144 = vunpack.c.l.b16 %v520
        %v1145 = vunpack.c.h.b16 %v520
        %v1146 = vunpack.c.l.b16 %v521
        %v1147 = vunpack.c.h.b16 %v521
        %v1148 = vunpack.c.l.b16 %v522
        %v1149 = vunpack.c.h.b16 %v522
        %v1150 = vunpack.c.l.b16 %v523
        %v1151 = vunpack.c.l.b16 %v524
        %v1152 = vunpack.c.h.b16 %v524
        %v1153 = vunpack.c.l.b16 %v525
        %v1154 = vunpack.c.h.b16 %v525
        %v1155 = vunpack.c.l.b16 %v526
        %v1156 = vunpack.c.h.b16 %v526
        %v1157 = vunpack.c.l.b16 %v527
        %v1158 = vunpack.c.l.b16 %v528
        %v1159 = vunpack.c.h.b16 %v528
        %v1160 = vunpack.c.l.b16 %v529
        %v1161 = vunpack.c.h.b16 %v529
        %v1162 = vunpack.c.l.b16 %v530
        %v1163 = vunpack.c.h.b16 %v530
        %v1164 = vunpack.c.l.b16 %v531
        %v1165 = vunpack.c.l.b16 %v532
        %v1166 = vunpack.c.h.b16 %v532
        %v1167 = vunpack.c.l.b16 %v533
        %v1168 = vunpack.c.h.b16 %v533
        %v1169 = vunpack.c.l.b16 %v534
        %v1170 = vunpack.c.h.b16 %v534
        %v1171 = vunpack.c.l.b16 %v535
        %v1172 = vunpack.c.l.b16 %v536
        %v1173 = vunpack.c.h.b16 %v536
        %v1174 = vunpack.c.l.b16 %v537
        %v1175 = vunpack.c.h.b16 %v537
        %v1176 = vunpack.c.l.b16 %v538
        %v1177 = vunpack.c.h.b16 %v538
        %v1178 = vunpack.c.l.b16 %v539
        %v1179 = vunpack.c.l.b16 %v540
        %v1180 = vunpack.c.h.b16 %v540
        %v1181 = vunpack.c.l.b16 %v541
        %v1182 = vunpack.c.h.b16 %v541
        %v1183 = vunpack.c.l.b16 %v542
        %v1184 = vunpack.c.h.b16 %v542
        %v1185 = vunpack.c.l.b16 %v543
        %v1186 = vunpack.c.l.b16 %v544
        %v1187 = vunpack.c.h.b16 %v544
        %v1188 = vunpack.c.l.b16 %v545
        %v1189 = vunpack.c.h.b16 %v545
        %v1190 = vunpack.c.l.b16 %v546
        %v1191 = vunpack.c.h.b16 %v546
        %v1192 = vunpack.c.l.b16 %v547
        %v1193 = vunpack.c.l.b16 %v548
        %v1194 = vunpack.c.h.b16 %v548
        %v1195 = vunpack.c.l.b16 %v549
        %v1196 = vunpack.c.h.b16 %v549
        %v1197 = vunpack.c.l.b16 %v550
        %v1198 = vunpack.c.h.b16 %v550
        %v1199 = vunpack.c.l.b16 %v551
        %v1200 = vunpack.c.l.b16 %v552
        %v1201 = vunpack.c.h.b16 %v552
        %v1202 = vunpack.c.l.b16 %v553
        %v1203 = vunpack.c.h.b16 %v553
        %v1204 = vunpack.c.l.b16 %v554
        %v1205 = vunpack.c.h.b16 %v554
        %v1206 = vunpack.c.l.b16 %v555
        %v1207 = vunpack.c.l.b16 %v556
        %v1208 = vunpack.c.h.b16 %v556
        %v1209 = vunpack.c.l.b16 %v557
        %v1210 = vunpack.c.h.b16 %v557
        %v1211 = vunpack.c.l.b16 %v558
        %v1212 = vunpack.c.h.b16 %v558
        %v1213 = vunpack.c.l.b16 %v559
        %v1214 = vunpack.c.l.b16 %v560
        %v1215 = vunpack.c.h.b16 %v560
        %v1216 = vunpack.c.l.b16 %v561
        %v1217 = vunpack.c.h.b16 %v561
        %v1218 = vunpack.c.l.b16 %v562
        %v1219 = vunpack.c.h.b16 %v562
        %v1220 = vunpack.c.l.b16 %v563
        %v1221 = vunpack.c.l.b16 %v564
        %v1222 = vunpack.c.h.b16 %v564
        %v1223 = vunpack.c.l.b16 %v565
        %v1224 = vunpack.c.h.b16 %v565
        %v1225 = vunpack.c.l.b16 %v566
        %v1226 = vunpack.c.h.b16 %v566
        %v1227 = vunpack.c.l.b16 %v567
        %v1228 = vunpack.c.l.b16 %v568
        %v1229 = vunpack.c.h.b16 %v568
        %v1230 = vunpack.c.l.b16 %v569
        %v1231 = vunpack.c.h.b16 %v569
        %v1232 = vunpack.c.l.b16 %v570
        %v1233 = vunpack.c.h.b16 %v570
        %v1234 = vunpack.c.l.b16 %v571
        %v1235 = vunpack.c.l.b16 %v572
        %v1236 = vunpack.c.h.b16 %v572
        %v1237 = vunpack.c.l.b16 %v573
        %v1238 = vunpack.c.h.b16 %v573
        %v1239 = vunpack.c.l.b16 %v574
        %v1240 = vunpack.c.h.b16 %v574
        %v1241 = vunpack.c.l.b16 %v575
        %v1242 = vunpack.c.l.b16 %v576
        %v1243 = vunpack.c.h.b16 %v576
        %v1244 = vunpack.c.l.b16 %v577
        %v1245 = vunpack.c.h.b16 %v577
        %v1246 = vunpack.c.l.b16 %v578
        %v1247 = vunpack.c.h.b16 %v578
        %v1248 = vunpack.c.l.b16 %v579
        %v1249 = vunpack.c.l.b16 %v580
        %v1250 = vunpack.c.h.b16 %v580
        %v1251 = vunpack.c.l.b16 %v581
        %v1252 = vunpack.c.h.b16 %v581
        %v1253 = vunpack.c.l.b16 %v582
        %v1254 = vunpack.c.h.b16 %v582
        %v1255 = vunpack.c.l.b16 %v583
        %v1256 = vunpack.c.l.b16 %v584
        %v1257 = vunpack.c.h.b16 %v584
        %v1258 = vunpack.c.l.b16 %v585
        %v1259 = vunpack.c.h.b16 %v585
        %v1260 = vunpack.c.l.b16 %v586
        %v1261 = vunpack.c.h.b16 %v586
        %v1262 = vunpack.c.l.b16 %v587
        %v1263 = vunpack.c.l.b16 %v588
        %v1264 = vunpack.c.h.b16 %v588
        %v1265 = vunpack.c.l.b16 %v589
        %v1266 = vunpack.c.h.b16 %v589
        %v1267 = vunpack.c.l.b16 %v590
        %v1268 = vunpack.c.h.b16 %v590
        %v1269 = vunpack.c.l.b16 %v591
        %v1270 = vunpack.c.l.b16 %v592
        %v1271 = vunpack.c.h.b16 %v592
        %v1272 = vunpack.c.l.b16 %v593
        %v1273 = vunpack.c.h.b16 %v593
        %v1274 = vunpack.c.l.b16 %v594
        %v1275 = vunpack.c.h.b16 %v594
        %v1276 = vunpack.c.l.b16 %v595
        %v1277 = vunpack.c.l.b16 %v596
        %v1278 = vunpack.c.h.b16 %v596
        %v1279 = vunpack.c.l.b16 %v597
        %v1280 = vunpack.c.h.b16 %v597
        %v1281 = vunpack.c.l.b16 %v598
        %v1282 = vunpack.c.h.b16 %v598
        %v1283 = vunpack.c.l.b16 %v599
        %v1284 = vunpack.c.l.b16 %v600
        %v1285 = vunpack.c.h.b16 %v600
        %v1286 = vunpack.c.l.b16 %v601
        %v1287 = vunpack.c.h.b16 %v601
        %v1288 = vunpack.c.l.b16 %v602
        %v1289 = vunpack.c.h.b16 %v602
        %v1290 = vunpack.c.l.b16 %v603
        %v1291 = vunpack.c.l.b16 %v604
        %v1292 = vunpack.c.h.b16 %v604
        %v1293 = vunpack.c.l.b16 %v605
        %v1294 = vunpack.c.h.b16 %v605
        %v1295 = vunpack.c.l.b16 %v606
        %v1296 = vunpack.c.h.b16 %v606
        %v1297 = vunpack.c.l.b16 %v607
        %v1298 = vunpack.c.l.b16 %v608
        %v1299 = vunpack.c.h.b16 %v608
        %v1300 = vunpack.c.l.b16 %v609
        %v1301 = vunpack.c.h.b16 %v609
        %v1302 = vunpack.c.l.b16 %v610
        %v1303 = vunpack.c.h.b16 %v610
        %v1304 = vunpack.c.l.b16 %v611
        %v1305 = vunpack.c.l.b16 %v612
        %v1306 = vunpack.c.h.b16 %v612
        %v1307 = vunpack.c.l.b16 %v613
        %v1308 = vunpack.c.h.b16 %v613
        %v1309 = vunpack.c.l.b16 %v614
        %v1310 = vunpack.c.h.b16 %v614
        %v1311 = vunpack.c.l.b16 %v615
        %v1312 = vunpack.c.l.b16 %v616
        %v1313 = vunpack.c.h.b16 %v616
        %v1314 = vunpack.c.l.b16 %v617
        %v1315 = vunpack.c.h.b16 %v617
        %v1316 = vunpack.c.l.b16 %v618
        %v1317 = vunpack.c.h.b16 %v618
        %v1318 = vunpack.c.l.b16 %v619
        %v1319 = vunpack.c.l.b16 %v620
        %v1320 = vunpack.c.h.b16 %v620
        %v1321 = vunpack.c.l.b16 %v621
        %v1322 = vunpack.c.h.b16 %v621
        %v1323 = vunpack.c.l.b16 %v622
        %v1324 = vunpack.c.h.b16 %v622
        %v1325 = vunpack.c.l.b16 %v623
        %v1326 = vunpack.c.l.b16 %v624
        %v1327 = vunpack.c.h.b16 %v624
        %v1328 = vunpack.c.l.b16 %v625
        %v1329 = vunpack.c.h.b16 %v625
        %v1330 = vunpack.c.l.b16 %v626
        %v1331 = vunpack.c.h.b16 %v626
        %v1332 = vunpack.c.l.b16 %v627
        %v1333 = vunpack.c.l.b16 %v628
        %v1334 = vunpack.c.h.b16 %v628
        %v1335 = vunpack.c.l.b16 %v629
        %v1336 = vunpack.c.h.b16 %v629
        %v1337 = vunpack.c.l.b16 %v630
        %v1338 = vunpack.c.h.b16 %v630
        %v1339 = vunpack.c.l.b16 %v631
        %v1340 = vunpack.c.l.b16 %v632
        %v1341 = vunpack.c.h.b16 %v632
        %v1342 = vunpack.c.l.b16 %v633
        %v1343 = vunpack.c.h.b16 %v633
        %v1344 = vunpack.c.l.b16 %v634
        %v1345 = vunpack.c.h.b16 %v634
        %v1346 = vunpack.c.l.b16 %v635
        %v1347 = vunpack.c.l.b16 %v636
        %v1348 = vunpack.c.h.b16 %v636
        %v1349 = vunpack.c.l.b16 %v637
        %v1350 = vunpack.c.h.b16 %v637
        %v1351 = vunpack.c.l.b16 %v638
        %v1352 = vunpack.c.h.b16 %v638
        %v1353 = vunpack.c.l.b16 %v639
        %v1354 = vunpack.c.l.b16 %v640
        %v1355 = vunpack.c.h.b16 %v640
        %v1356 = vunpack.c.l.b16 %v641
        %v1357 = vunpack.c.h.b16 %v641
        %v1358 = vunpack.c.l.b16 %v642
        %v1359 = vunpack.c.h.b16 %v642
        %v1360 = vunpack.c.l.b16 %v643
        %v1361 = vunpack.c.l.b16 %v644
        %v1362 = vunpack.c.h.b16 %v644
        %v1363 = vunpack.c.l.b16 %v645
        %v1364 = vunpack.c.h.b16 %v645
        %v1365 = vunpack.c.l.b16 %v646
        %v1366 = vunpack.c.h.b16 %v646
        %v1367 = vunpack.c.l.b16 %v647
        %v1368 = vunpack.c.l.b16 %v648
        %v1369 = vunpack.c.h.b16 %v648
        %v1370 = vunpack.c.l.b16 %v649
        %v1371 = vunpack.c.h.b16 %v649
        %v1372 = vunpack.c.l.b16 %v650
        %v1373 = vunpack.c.h.b16 %v650
        %v1374 = vunpack.c.l.b16 %v651
        %v1375 = vunpack.c.l.b16 %v652
        %v1376 = vunpack.c.h.b16 %v652
        %v1377 = vunpack.c.l.b16 %v653
        %v1378 = vunpack.c.h.b16 %v653
        %v1379 = vunpack.c.l.b16 %v654
        %v1380 = vunpack.c.h.b16 %v654
        %v1381 = vunpack.c.l.b16 %v655
        %v1382 = vunpack.c.l.b16 %v656
        %v1383 = vunpack.c.h.b16 %v656
        %v1384 = vunpack.c.l.b16 %v657
        %v1385 = vunpack.c.h.b16 %v657
        %v1386 = vunpack.c.l.b16 %v658
        %v1387 = vunpack.c.h.b16 %v658
        %v1388 = vunpack.c.l.b16 %v659
        %v1389 = vunpack.c.l.b16 %v660
        %v1390 = vunpack.c.h.b16 %v660
        %v1391 = vunpack.c.l.b16 %v661
        %v1392 = vunpack.c.h.b16 %v661
        %v1393 = vunpack.c.l.b16 %v662
        %v1394 = vunpack.c.h.b16 %v662
        %v1395 = vunpack.c.l.b16 %v663
        %v1396 = vunpack.c.l.b16 %v664
        %v1397 = vunpack.c.h.b16 %v664
        %v1398 = vunpack.c.l.b16 %v665
        %v1399 = vunpack.c.h.b16 %v665
        %v1400 = vunpack.c.l.b16 %v666
        %v1401 = vunpack.c.h.b16 %v666
        %v1402 = vunpack.c.l.b16 %v667
        %v1403 = vunpack.c.l.b16 %v668
        %v1404 = vunpack.c.h.b16 %v668
        %v1405 = vunpack.c.l.b16 %v669
        %v1406 = vunpack.c.h.b16 %v669
        %v1407 = vunpack.c.l.b16 %v670
        %v1408 = vunpack.c.h.b16 %v670
        %v1409 = vunpack.c.l.b16 %v671
        %v1410 = vunpack.c.l.b16 %v672
        %v1411 = vunpack.c.h.b16 %v672
        %v1412 = vunpack.c.l.b16 %v673
        %v1413 = vunpack.c.h.b16 %v673
        %v1414 = vunpack.c.l.b16 %v674
        %v1415 = vunpack.c.h.b16 %v674
        %v1416 = vunpack.c.l.b16 %v675
        %v1417 = vpack.c.b16 %v976, %v969
        %v1418 = vpack.c.b16 %v977, %v970
        %v1419 = vpack.c.b16 %v978, %v971
        %v1420 = vpack.c.b16 %v979, %v972
        %v1421 = vpack.c.b16 %v980, %v973
        %v1422 = vpack.c.b16 %v981, %v974
        %v1423 = vpack.c.b16 %v982, %v975
        %v1424 = vpack.c.b16 %v990, %v983
        %v1425 = vpack.c.b16 %v991, %v984
        %v1426 = vpack.c.b16 %v992, %v985
        %v1427 = vpack.c.b16 %v993, %v986
        %v1428 = vpack.c.b16 %v994, %v987
        %v1429 = vpack.c.b16 %v995, %v988
        %v1430 = vpack.c.b16 %v996, %v989
        %v1431 = vpack.c.b16 %v1004, %v997
        %v1432 = vpack.c.b16 %v1005, %v998
        %v1433 = vpack.c.b16 %v1006, %v999
        %v1434 = vpack.c.b16 %v1007, %v1000
        %v1435 = vpack.c.b16 %v1008, %v1001
        %v1436 = vpack.c.b16 %v1009, %v1002
        %v1437 = vpack.c.b16 %v1010, %v1003
        %v1438 = vpack.c.b16 %v1018, %v1011
        %v1439 = vpack.c.b16 %v1019, %v1012
        %v1440 = vpack.c.b16 %v1020, %v1013
        %v1441 = vpack.c.b16 %v1021, %v1014
        %v1442 = vpack.c.b16 %v1022, %v1015
        %v1443 = vpack.c.b16 %v1023, %v1016
        %v1444 = vpack.c.b16 %v1024, %v1017
        %v1445 = vpack.c.b16 %v1032, %v1025
        %v1446 = vpack.c.b16 %v1033, %v1026
        %v1447 = vpack.c.b16 %v1034, %v1027
        %v1448 = vpack.c.b16 %v1035, %v1028
        %v1449 = vpack.c.b16 %v1036, %v1029
        %v1450 = vpack.c.b16 %v1037, %v1030
        %v1451 = vpack.c.b16 %v1038, %v1031
        %v1452 = vpack.c.b16 %v1046, %v1039
        %v1453 = vpack.c.b16 %v1047, %v1040
        %v1454 = vpack.c.b16 %v1048, %v1041
        %v1455 = vpack.c.b16 %v1049, %v1042
        %v1456 = vpack.c.b16 %v1050, %v1043
        %v1457 = vpack.c.b16 %v1051, %v1044
        %v1458 = vpack.c.b16 %v1052, %v1045
        %v1459 = vpack.c.b16 %v1060, %v1053
        %v1460 = vpack.c.b16 %v1061, %v1054
        %v1461 = vpack.c.b16 %v1062, %v1055
        %v1462 = vpack.c.b16 %v1063, %v1056
        %v1463 = vpack.c.b16 %v1064, %v1057
        %v1464 = vpack.c.b16 %v1065, %v1058
        %v1465 = vpack.c.b16 %v1066, %v1059
        %v1466 = vpack.c.b16 %v1074, %v1067
        %v1467 = vpack.c.b16 %v1075, %v1068
        %v1468 = vpack.c.b16 %v1076, %v1069
        %v1469 = vpack.c.b16 %v1077, %v1070
        %v1470 = vpack.c.b16 %v1078, %v1071
        %v1471 = vpack.c.b16 %v1079, %v1072
        %v1472 = vpack.c.b16 %v1080, %v1073
        %v1473 = vpack.c.b16 %v1088, %v1081
        %v1474 = vpack.c.b16 %v1089, %v1082
        %v1475 = vpack.c.b16 %v1090, %v1083
        %v1476 = vpack.c.b16 %v1091, %v1084
        %v1477 = vpack.c.b16 %v1092, %v1085
        %v1478 = vpack.c.b16 %v1093, %v1086
        %v1479 = vpack.c.b16 %v1094, %v1087
        %v1480 = vpack.c.b16 %v1102, %v1095
        %v1481 = vpack.c.b16 %v1103, %v1096
        %v1482 = vpack.c.b16 %v1104, %v1097
        %v1483 = vpack.c.b16 %v1105, %v1098
        %v1484 = vpack.c.b16 %v1106, %v1099
        %v1485 = vpack.c.b16 %v1107, %v1100
        %v1486 = vpack.c.b16 %v1108, %v1101
        %v1487 = vpack.c.b16 %v1116, %v1109
        %v1488 = vpack.c.b16 %v1117, %v1110
        %v1489 = vpack.c.b16 %v1118, %v1111
        %v1490 = vpack.c.b16 %v1119, %v1112
        %v1491 = vpack.c.b16 %v1120, %v1113
        %v1492 = vpack.c.b16 %v1121, %v1114
        %v1493 = vpack.c.b16 %v1122, %v1115
        %v1494 = vpack.c.b16 %v1130, %v1123
        %v1495 = vpack.c.b16 %v1131, %v1124
        %v1496 = vpack.c.b16 %v1132, %v1125
        %v1497 = vpack.c.b16 %v1133, %v1126
        %v1498 = vpack.c.b16 %v1134, %v1127
        %v1499 = vpack.c.b16 %v1135, %v1128
        %v1500 = vpack.c.b16 %v1136, %v1129
        %v1501 = vpack.c.b16 %v1144, %v1137
        %v1502 = vpack.c.b16 %v1145, %v1138
        %v1503 = vpack.c.b16 %v1146, %v1139
        %v1504 = vpack.c.b16 %v1147, %v1140
        %v1505 = vpack.c.b16 %v1148, %v1141
        %v1506 = vpack.c.b16 %v1149, %v1142
        %v1507 = vpack.c.b16 %v1150, %v1143
        %v1508 = vpack.c.b16 %v1158, %v1151
        %v1509 = vpack.c.b16 %v1159, %v1152
        %v1510 = vpack.c.b16 %v1160, %v1153
        %v1511 = vpack.c.b16 %v1161, %v1154
        %v1512 = vpack.c.b16 %v1162, %v1155
        %v1513 = vpack.c.b16 %v1163, %v1156
        %v1514 = vpack.c.b16 %v1164, %v1157
        %v1515 = vpack.c.b16 %v1172, %v1165
        %v1516 = vpack.c.b16 %v1173, %v1166
        %v1517 = vpack.c.b16 %v1174, %v1167
        %v1518 = vpack.c.b16 %v1175, %v1168
        %v1519 = vpack.c.b16 %v1176, %v1169
        %v1520 = vpack.c.b16 %v1177, %v1170
        %v1521 = vpack.c.b16 %v1178, %v1171
        %v1522 = vpack.c.b16 %v1186, %v1179
        %v1523 = vpack.c.b16 %v1187, %v1180
        %v1524 = vpack.c.b16 %v1188, %v1181
        %v1525 = vpack.c.b16 %v1189, %v1182
        %v1526 = vpack.c.b16 %v1190, %v1183
        %v1527 = vpack.c.b16 %v1191, %v1184
        %v1528 = vpack.c.b16 %v1192, %v1185
        %v1529 = vpack.c.b16 %v1200, %v1193
        %v1530 = vpack.c.b16 %v1201, %v1194
        %v1531 = vpack.c.b16 %v1202, %v1195
        %v1532 = vpack.c.b16 %v1203, %v1196
        %v1533 = vpack.c.b16 %v1204, %v1197
        %v1534 = vpack.c.b16 %v1205, %v1198
        %v1535 = vpack.c.b16 %v1206, %v1199
        %v1536 = vpack.c.b16 %v1214, %v1207
        %v1537 = vpack.c.b16 %v1215, %v1208
        %v1538 = vpack.c.b16 %v1216, %v1209
        %v1539 = vpack.c.b16 %v1217, %v1210
        %v1540 = vpack.c.b16 %v1218, %v1211
        %v1541 = vpack.c.b16 %v1219, %v1212
        %v1542 = vpack.c.b16 %v1220, %v1213
        %v1543 = vpack.c.b16 %v1228, %v1221
        %v1544 = vpack.c.b16 %v1229, %v1222
        %v1545 = vpack.c.b16 %v1230, %v1223
        %v1546 = vpack.c.b16 %v1231, %v1224
        %v1547 = vpack.c.b16 %v1232, %v1225
        %v1548 = vpack.c.b16 %v1233, %v1226
        %v1549 = vpack.c.b16 %v1234, %v1227
        %v1550 = vpack.c.b16 %v1242, %v1235
        %v1551 = vpack.c.b16 %v1243, %v1236
        %v1552 = vpack.c.b16 %v1244, %v1237
        %v1553 = vpack.c.b16 %v1245, %v1238
        %v1554 = vpack.c.b16 %v1246, %v1239
        %v1555 = vpack.c.b16 %v1247, %v1240
        %v1556 = vpack.c.b16 %v1248, %v1241
        %v1557 = vpack.c.b16 %v1256, %v1249
        %v1558 = vpack.c.b16 %v1257, %v1250
        %v1559 = vpack.c.b16 %v1258, %v1251
        %v1560 = vpack.c.b16 %v1259, %v1252
        %v1561 = vpack.c.b16 %v1260, %v1253
        %v1562 = vpack.c.b16 %v1261, %v1254
        %v1563 = vpack.c.b16 %v1262, %v1255
        %v1564 = vpack.c.b16 %v1270, %v1263
        %v1565 = vpack.c.b16 %v1271, %v1264
        %v1566 = vpack.c.b16 %v1272, %v1265
        %v1567 = vpack.c.b16 %v1273, %v1266
        %v1568 = vpack.c.b16 %v1274, %v1267
        %v1569 = vpack.c.b16 %v1275, %v1268
        %v1570 = vpack.c.b16 %v1276, %v1269
        %v1571 = vpack.c.b16 %v1284, %v1277
        %v1572 = vpack.c.b16 %v1285, %v1278
        %v1573 = vpack.c.b16 %v1286, %v1279
        %v1574 = vpack.c.b16 %v1287, %v1280
        %v1575 = vpack.c.b16 %v1288, %v1281
        %v1576 = vpack.c.b16 %v1289, %v1282
        %v1577 = vpack.c.b16 %v1290, %v1283
        %v1578 = vpack.c.b16 %v1298, %v1291
        %v1579 = vpack.c.b16 %v1299, %v1292
        %v1580 = vpack.c.b16 %v1300, %v1293
        %v1581 = vpack.c.b16 %v1301, %v1294
        %v1582 = vpack.c.b16 %v1302, %v1295
        %v1583 = vpack.c.b16 %v1303, %v1296
        %v1584 = vpack.c.b16 %v1304, %v1297
        %v1585 = vpack.c.b16 %v1312, %v1305
        %v1586 = vpack.c.b16 %v1313, %v1306
        %v1587 = vpack.c.b16 %v1314, %v1307
        %v1588 = vpack.c.b16 %v1315, %v1308
        %v1589 = vpack.c.b16 %v1316, %v1309
        %v1590 = vpack.c.b16 %v1317, %v1310
        %v1591 = vpack.c.b16 %v1318, %v1311
        %v1592 = vpack.c.b16 %v1326, %v1319
        %v1593 = vpack.c.b16 %v1327, %v1320
        %v1594 = vpack.c.b16 %v1328, %v1321
        %v1595 = vpack.c.b16 %v1329, %v1322
        %v1596 = vpack.c.b16 %v1330, %v1323
        %v1597 = vpack.c.b16 %v1331, %v1324
        %v1598 = vpack.c.b16 %v1332, %v1325
        %v1599 = vpack.c.b16 %v1340, %v1333
        %v1600 = vpack.c.b16 %v1341, %v1334
        %v1601 = vpack.c.b16 %v1342, %v1335
        %v1602 = vpack.c.b16 %v1343, %v1336
        %v1603 = vpack.c.b16 %v1344, %v1337
        %v1604 = vpack.c.b16 %v1345, %v1338
        %v1605 = vpack.c.b16 %v1346, %v1339
        %v1606 = vpack.c.b16 %v1354, %v1347
        %v1607 = vpack.c.b16 %v1355, %v1348
        %v1608 = vpack.c.b16 %v1356, %v1349
        %v1609 = vpack.c.b16 %v1357, %v1350
        %v1610 = vpack.c.b16 %v1358, %v1351
        %v1611 = vpack.c.b16 %v1359, %v1352
        %v1612 = vpack.c.b16 %v1360, %v1353
        %v1613 = vpack.c.b16 %v1368, %v1361
        %v1614 = vpack.c.b16 %v1369, %v1362
        %v1615 = vpack.c.b16 %v1370, %v1363
        %v1616 = vpack.c.b16 %v1371, %v1364
        %v1617 = vpack.c.b16 %v1372, %v1365
        %v1618 = vpack.c.b16 %v1373, %v1366
        %v1619 = vpack.c.b16 %v1374, %v1367
        %v1620 = vpack.c.b16 %v1382, %v1375
        %v1621 = vpack.c.b16 %v1383, %v1376
        %v1622 = vpack.c.b16 %v1384, %v1377
        %v1623 = vpack.c.b16 %v1385, %v1378
        %v1624 = vpack.c.b16 %v1386, %v1379
        %v1625 = vpack.c.b16 %v1387, %v1380
        %v1626 = vpack.c.b16 %v1388, %v1381
        %v1627 = vpack.c.b16 %v1396, %v1389
        %v1628 = vpack.c.b16 %v1397, %v1390
        %v1629 = vpack.c.b16 %v1398, %v1391
        %v1630 = vpack.c.b16 %v1399, %v1392
        %v1631 = vpack.c.b16 %v1400, %v1393
        %v1632 = vpack.c.b16 %v1401, %v1394
        %v1633 = vpack.c.b16 %v1402, %v1395
        %v1634 = vpack.c.b16 %v1410, %v1403
        %v1635 = vpack.c.b16 %v1411, %v1404
        %v1636 = vpack.c.b16 %v1412, %v1405
        %v1637 = vpack.c.b16 %v1413, %v1406
        %v1638 = vpack.c.b16 %v1414, %v1407
        %v1639 = vpack.c.b16 %v1415, %v1408
        %v1640 = vpack.c.b16 %v1416, %v1409
        %1865 = vmatprep.subr.bf16.mxu0 %v1418
        %1866 = vmatpush1.bf16.msra.mxu0 %v1417
        %1867 = vmatprep.subr.bf16.mxu0 %v1425
        %1868 = vmatpush1.bf16.msra.mxu0 %v1424
        %1869 = vmatprep.subr.bf16.mxu0 %v1432
        %1870 = vmatpush1.bf16.msra.mxu0 %v1431
        %1871 = vmatprep.subr.bf16.mxu0 %v1439
        %1872 = vmatpush1.bf16.msra.mxu0 %v1438
        %1873 = vmatprep.subr.bf16.mxu0 %v1446
        %1874 = vmatpush1.bf16.msra.mxu0 %v1445
        %1875 = vmatprep.subr.bf16.mxu0 %v1453
        %1876 = vmatpush1.bf16.msra.mxu0 %v1452
        %1877 = vmatprep.subr.bf16.mxu0 %v1460
        %1878 = vmatpush1.bf16.msra.mxu0 %v1459
        %1879 = vmatprep.subr.bf16.mxu0 %v1467
        %1880 = vmatpush1.bf16.msra.mxu0 %v1466
        %1881 = vmatprep.subr.bf16.mxu0 %v1474
        %1882 = vmatpush1.bf16.msra.mxu0 %v1473
        %1883 = vmatprep.subr.bf16.mxu0 %v1481
        %1884 = vmatpush1.bf16.msra.mxu0 %v1480
        %1885 = vmatprep.subr.bf16.mxu0 %v1488
        %1886 = vmatpush1.bf16.msra.mxu0 %v1487
        %1887 = vmatprep.subr.bf16.mxu0 %v1495
        %1888 = vmatpush1.bf16.msra.mxu0 %v1494
        %1889 = vmatprep.subr.bf16.mxu0 %v1502
        %1890 = vmatpush1.bf16.msra.mxu0 %v1501
        %1891 = vmatprep.subr.bf16.mxu0 %v1509
        %1892 = vmatpush1.bf16.msra.mxu0 %v1508
        %1893 = vmatprep.subr.bf16.mxu0 %v1516
        %1894 = vmatpush1.bf16.msra.mxu0 %v1515
        %1895 = vmatprep.subr.bf16.mxu0 %v1523
        %1896 = vmatpush1.bf16.msra.mxu0 %v1522
        %1897 = vmatprep.mubr.bf16.mxu0 %v417
        %1898 = vmatmul.mubr.bf16.gmra.mrb[0].mxu0 %v416
        %v1899 = vpop.f32.mrb[0].mxu0
        %v1900 = vadd.f32 %v681, %v1899
        %v1901 = vpop.f32.mrb[0].mxu0
        %v1902 = vadd.f32 %v685, %v1901
        %v1903 = vpop.f32.mrb[0].mxu0
        %v1904 = vpop.f32.mrb[0].mxu0
        %1905 = vdwg.mxu0
        %1906 = vmatprep.subr.bf16.mxu0 %v1530
        %1907 = vmatpush1.bf16.msra.mxu0 %v1529
        %1908 = vmatprep.subr.bf16.mxu0 %v1537
        %1909 = vmatpush1.bf16.msra.mxu0 %v1536
        %1910 = vmatprep.subr.bf16.mxu0 %v1544
        %1911 = vmatpush1.bf16.msra.mxu0 %v1543
        %1912 = vmatprep.subr.bf16.mxu0 %v1551
        %1913 = vmatpush1.bf16.msra.mxu0 %v1550
        %1914 = vmatprep.subr.bf16.mxu0 %v1558
        %1915 = vmatpush1.bf16.msra.mxu0 %v1557
        %1916 = vmatprep.subr.bf16.mxu0 %v1565
        %1917 = vmatpush1.bf16.msra.mxu0 %v1564
        %1918 = vmatprep.subr.bf16.mxu0 %v1572
        %1919 = vmatpush1.bf16.msra.mxu0 %v1571
        %1920 = vmatprep.subr.bf16.mxu0 %v1579
        %1921 = vmatpush1.bf16.msra.mxu0 %v1578
        %1922 = vmatprep.subr.bf16.mxu0 %v1586
        %1923 = vmatpush1.bf16.msra.mxu0 %v1585
        %1924 = vmatprep.subr.bf16.mxu0 %v1593
        %1925 = vmatpush1.bf16.msra.mxu0 %v1592
        %1926 = vmatprep.subr.bf16.mxu0 %v1600
        %1927 = vmatpush1.bf16.msra.mxu0 %v1599
        %1928 = vmatprep.subr.bf16.mxu0 %v1607
        %1929 = vmatpush1.bf16.msra.mxu0 %v1606
        %1930 = vmatprep.subr.bf16.mxu0 %v1614
        %1931 = vmatpush1.bf16.msra.mxu0 %v1613
        %1932 = vmatprep.subr.bf16.mxu0 %v1621
        %1933 = vmatpush1.bf16.msra.mxu0 %v1620
        %1934 = vmatprep.subr.bf16.mxu0 %v1628
        %1935 = vmatpush1.bf16.msra.mxu0 %v1627
        %1936 = vmatprep.subr.bf16.mxu0 %v1635
        %1937 = vmatpush1.bf16.msra.mxu0 %v1634
        %1938 = vmatprep.mubr.bf16.mxu0 %v419
        %1939 = vmatmul.mubr.bf16.gmra.mrb[0].mxu0 %v418
        %v1940 = vpop.f32.mrb[0].mxu0
        %v1941 = vadd.f32 %v1900, %v1940
        %v1942 = vpop.f32.mrb[0].mxu0
        %v1943 = vadd.f32 %v1902, %v1942
        %v1944 = vpop.f32.mrb[0].mxu0
        %v1945 = vpop.f32.mrb[0].mxu0
        %1946 = vdwg.mxu0
        %1947 = vmatprep.subr.bf16.mxu0 %v1420
        %1948 = vmatpush1.bf16.msra.mxu0 %v1419
        %1949 = vmatprep.subr.bf16.mxu0 %v1427
        %1950 = vmatpush1.bf16.msra.mxu0 %v1426
        %1951 = vmatprep.subr.bf16.mxu0 %v1434
        %1952 = vmatpush1.bf16.msra.mxu0 %v1433
        %1953 = vmatprep.subr.bf16.mxu0 %v1441
        %1954 = vmatpush1.bf16.msra.mxu0 %v1440
        %1955 = vmatprep.subr.bf16.mxu0 %v1448
        %1956 = vmatpush1.bf16.msra.mxu0 %v1447
        %1957 = vmatprep.subr.bf16.mxu0 %v1455
        %1958 = vmatpush1.bf16.msra.mxu0 %v1454
        %1959 = vmatprep.subr.bf16.mxu0 %v1462
        %1960 = vmatpush1.bf16.msra.mxu0 %v1461
        %1961 = vmatprep.subr.bf16.mxu0 %v1469
        %1962 = vmatpush1.bf16.msra.mxu0 %v1468
        %1963 = vmatprep.subr.bf16.mxu0 %v1476
        %1964 = vmatpush1.bf16.msra.mxu0 %v1475
        %1965 = vmatprep.subr.bf16.mxu0 %v1483
        %1966 = vmatpush1.bf16.msra.mxu0 %v1482
        %1967 = vmatprep.subr.bf16.mxu0 %v1490
        %1968 = vmatpush1.bf16.msra.mxu0 %v1489
        %1969 = vmatprep.subr.bf16.mxu0 %v1497
        %1970 = vmatpush1.bf16.msra.mxu0 %v1496
        %1971 = vmatprep.subr.bf16.mxu0 %v1504
        %1972 = vmatpush1.bf16.msra.mxu0 %v1503
        %1973 = vmatprep.subr.bf16.mxu0 %v1511
        %1974 = vmatpush1.bf16.msra.mxu0 %v1510
        %1975 = vmatprep.subr.bf16.mxu0 %v1518
        %1976 = vmatpush1.bf16.msra.mxu0 %v1517
        %1977 = vmatprep.subr.bf16.mxu0 %v1525
        %1978 = vmatpush1.bf16.msra.mxu0 %v1524
        %1979 = vmatprep.mubr.bf16.mxu0 %v417
        %1980 = vmatmul.mubr.bf16.gmra.mrb[0].mxu0 %v416
        %v1981 = vpop.f32.mrb[0].mxu0
        %v1982 = vadd.f32 %v689, %v1981
        %v1983 = vpop.f32.mrb[0].mxu0
        %v1984 = vadd.f32 %v693, %v1983
        %v1985 = vpop.f32.mrb[0].mxu0
        %v1986 = vpop.f32.mrb[0].mxu0
        %1987 = vdwg.mxu0
        %1988 = vmatprep.subr.bf16.mxu0 %v1532
        %1989 = vmatpush1.bf16.msra.mxu0 %v1531
        %1990 = vmatprep.subr.bf16.mxu0 %v1539
        %1991 = vmatpush1.bf16.msra.mxu0 %v1538
        %1992 = vmatprep.subr.bf16.mxu0 %v1546
        %1993 = vmatpush1.bf16.msra.mxu0 %v1545
        %1994 = vmatprep.subr.bf16.mxu0 %v1553
        %1995 = vmatpush1.bf16.msra.mxu0 %v1552
        %1996 = vmatprep.subr.bf16.mxu0 %v1560
        %1997 = vmatpush1.bf16.msra.mxu0 %v1559
        %1998 = vmatprep.subr.bf16.mxu0 %v1567
        %1999 = vmatpush1.bf16.msra.mxu0 %v1566
        %2000 = vmatprep.subr.bf16.mxu0 %v1574
        %2001 = vmatpush1.bf16.msra.mxu0 %v1573
        %2002 = vmatprep.subr.bf16.mxu0 %v1581
        %2003 = vmatpush1.bf16.msra.mxu0 %v1580
        %2004 = vmatprep.subr.bf16.mxu0 %v1588
        %2005 = vmatpush1.bf16.msra.mxu0 %v1587
        %2006 = vmatprep.subr.bf16.mxu0 %v1595
        %2007 = vmatpush1.bf16.msra.mxu0 %v1594
        %2008 = vmatprep.subr.bf16.mxu0 %v1602
        %2009 = vmatpush1.bf16.msra.mxu0 %v1601
        %2010 = vmatprep.subr.bf16.mxu0 %v1609
        %2011 = vmatpush1.bf16.msra.mxu0 %v1608
        %2012 = vmatprep.subr.bf16.mxu0 %v1616
        %2013 = vmatpush1.bf16.msra.mxu0 %v1615
        %2014 = vmatprep.subr.bf16.mxu0 %v1623
        %2015 = vmatpush1.bf16.msra.mxu0 %v1622
        %2016 = vmatprep.subr.bf16.mxu0 %v1630
        %2017 = vmatpush1.bf16.msra.mxu0 %v1629
        %2018 = vmatprep.subr.bf16.mxu0 %v1637
        %2019 = vmatpush1.bf16.msra.mxu0 %v1636
        %2020 = vmatprep.mubr.bf16.mxu0 %v419
        %2021 = vmatmul.mubr.bf16.gmra.mrb[0].mxu0 %v418
        %v2022 = vpop.f32.mrb[0].mxu0
        %v2023 = vadd.f32 %v1982, %v2022
        %v2024 = vpop.f32.mrb[0].mxu0
        %v2025 = vadd.f32 %v1984, %v2024
        %v2026 = vpop.f32.mrb[0].mxu0
        %v2027 = vpop.f32.mrb[0].mxu0
        %2028 = vdwg.mxu0
        %2029 = vmatprep.subr.bf16.mxu0 %v1422
        %2030 = vmatpush1.bf16.msra.mxu0 %v1421
        %2031 = vmatprep.subr.bf16.mxu0 %v1429
        %2032 = vmatpush1.bf16.msra.mxu0 %v1428
        %2033 = vmatprep.subr.bf16.mxu0 %v1436
        %2034 = vmatpush1.bf16.msra.mxu0 %v1435
        %2035 = vmatprep.subr.bf16.mxu0 %v1443
        %2036 = vmatpush1.bf16.msra.mxu0 %v1442
        %2037 = vmatprep.subr.bf16.mxu0 %v1450
        %2038 = vmatpush1.bf16.msra.mxu0 %v1449
        %2039 = vmatprep.subr.bf16.mxu0 %v1457
        %2040 = vmatpush1.bf16.msra.mxu0 %v1456
        %2041 = vmatprep.subr.bf16.mxu0 %v1464
        %2042 = vmatpush1.bf16.msra.mxu0 %v1463
        %2043 = vmatprep.subr.bf16.mxu0 %v1471
        %2044 = vmatpush1.bf16.msra.mxu0 %v1470
        %2045 = vmatprep.subr.bf16.mxu0 %v1478
        %2046 = vmatpush1.bf16.msra.mxu0 %v1477
        %2047 = vmatprep.subr.bf16.mxu0 %v1485
        %2048 = vmatpush1.bf16.msra.mxu0 %v1484
        %2049 = vmatprep.subr.bf16.mxu0 %v1492
        %2050 = vmatpush1.bf16.msra.mxu0 %v1491
        %2051 = vmatprep.subr.bf16.mxu0 %v1499
        %2052 = vmatpush1.bf16.msra.mxu0 %v1498
        %2053 = vmatprep.subr.bf16.mxu0 %v1506
        %2054 = vmatpush1.bf16.msra.mxu0 %v1505
        %2055 = vmatprep.subr.bf16.mxu0 %v1513
        %2056 = vmatpush1.bf16.msra.mxu0 %v1512
        %2057 = vmatprep.subr.bf16.mxu0 %v1520
        %2058 = vmatpush1.bf16.msra.mxu0 %v1519
        %2059 = vmatprep.subr.bf16.mxu0 %v1527
        %2060 = vmatpush1.bf16.msra.mxu0 %v1526
        %2061 = vmatprep.mubr.bf16.mxu0 %v417
        %2062 = vmatmul.mubr.bf16.gmra.mrb[0].mxu0 %v416
        %v2063 = vpop.f32.mrb[0].mxu0
        %v2064 = vadd.f32 %v697, %v2063
        %v2065 = vpop.f32.mrb[0].mxu0
        %v2066 = vadd.f32 %v701, %v2065
        %v2067 = vpop.f32.mrb[0].mxu0
        %v2068 = vpop.f32.mrb[0].mxu0
        %2069 = vdwg.mxu0
        %2070 = vmatprep.subr.bf16.mxu0 %v1534
        %2071 = vmatpush1.bf16.msra.mxu0 %v1533
        %2072 = vmatprep.subr.bf16.mxu0 %v1541
        %2073 = vmatpush1.bf16.msra.mxu0 %v1540
        %2074 = vmatprep.subr.bf16.mxu0 %v1548
        %2075 = vmatpush1.bf16.msra.mxu0 %v1547
        %2076 = vmatprep.subr.bf16.mxu0 %v1555
        %2077 = vmatpush1.bf16.msra.mxu0 %v1554
        %2078 = vmatprep.subr.bf16.mxu0 %v1562
        %2079 = vmatpush1.bf16.msra.mxu0 %v1561
        %2080 = vmatprep.subr.bf16.mxu0 %v1569
        %2081 = vmatpush1.bf16.msra.mxu0 %v1568
        %2082 = vmatprep.subr.bf16.mxu0 %v1576
        %2083 = vmatpush1.bf16.msra.mxu0 %v1575
        %2084 = vmatprep.subr.bf16.mxu0 %v1583
        %2085 = vmatpush1.bf16.msra.mxu0 %v1582
        %2086 = vmatprep.subr.bf16.mxu0 %v1590
        %2087 = vmatpush1.bf16.msra.mxu0 %v1589
        %2088 = vmatprep.subr.bf16.mxu0 %v1597
        %2089 = vmatpush1.bf16.msra.mxu0 %v1596
        %2090 = vmatprep.subr.bf16.mxu0 %v1604
        %2091 = vmatpush1.bf16.msra.mxu0 %v1603
        %2092 = vmatprep.subr.bf16.mxu0 %v1611
        %2093 = vmatpush1.bf16.msra.mxu0 %v1610
        %2094 = vmatprep.subr.bf16.mxu0 %v1618
        %2095 = vmatpush1.bf16.msra.mxu0 %v1617
        %2096 = vmatprep.subr.bf16.mxu0 %v1625
        %2097 = vmatpush1.bf16.msra.mxu0 %v1624
        %2098 = vmatprep.subr.bf16.mxu0 %v1632
        %2099 = vmatpush1.bf16.msra.mxu0 %v1631
        %2100 = vmatprep.subr.bf16.mxu0 %v1639
        %2101 = vmatpush1.bf16.msra.mxu0 %v1638
        %2102 = vmatprep.mubr.bf16.mxu0 %v419
        %2103 = vmatmul.mubr.bf16.gmra.mrb[0].mxu0 %v418
        %v2104 = vpop.f32.mrb[0].mxu0
        %v2105 = vadd.f32 %v2064, %v2104
        %v2106 = vpop.f32.mrb[0].mxu0
        %v2107 = vadd.f32 %v2066, %v2106
        %v2108 = vpop.f32.mrb[0].mxu0
        %v2109 = vpop.f32.mrb[0].mxu0
        %2110 = vdwg.mxu0
        %2111 = vmatprep.subr.bf16.mxu0 0
        %2112 = vmatpush1.bf16.msra.mxu0 %v1423
        %2113 = vmatprep.subr.bf16.mxu0 0
        %2114 = vmatpush1.bf16.msra.mxu0 %v1430
        %2115 = vmatprep.subr.bf16.mxu0 0
        %2116 = vmatpush1.bf16.msra.mxu0 %v1437
        %2117 = vmatprep.subr.bf16.mxu0 0
        %2118 = vmatpush1.bf16.msra.mxu0 %v1444
        %2119 = vmatprep.subr.bf16.mxu0 0
        %2120 = vmatpush1.bf16.msra.mxu0 %v1451
        %2121 = vmatprep.subr.bf16.mxu0 0
        %2122 = vmatpush1.bf16.msra.mxu0 %v1458
        %2123 = vmatprep.subr.bf16.mxu0 0
        %2124 = vmatpush1.bf16.msra.mxu0 %v1465
        %2125 = vmatprep.subr.bf16.mxu0 0
        %2126 = vmatpush1.bf16.msra.mxu0 %v1472
        %2127 = vmatprep.subr.bf16.mxu0 0
        %2128 = vmatpush1.bf16.msra.mxu0 %v1479
        %2129 = vmatprep.subr.bf16.mxu0 0
        %2130 = vmatpush1.bf16.msra.mxu0 %v1486
        %2131 = vmatprep.subr.bf16.mxu0 0
        %2132 = vmatpush1.bf16.msra.mxu0 %v1493
        %2133 = vmatprep.subr.bf16.mxu0 0
        %2134 = vmatpush1.bf16.msra.mxu0 %v1500
        %2135 = vmatprep.subr.bf16.mxu0 0
        %2136 = vmatpush1.bf16.msra.mxu0 %v1507
        %2137 = vmatprep.subr.bf16.mxu0 0
        %2138 = vmatpush1.bf16.msra.mxu0 %v1514
        %2139 = vmatprep.subr.bf16.mxu0 0
        %2140 = vmatpush1.bf16.msra.mxu0 %v1521
        %2141 = vmatprep.subr.bf16.mxu0 0
        %2142 = vmatpush1.bf16.msra.mxu0 %v1528
        %2143 = vmatprep.mubr.bf16.mxu0 %v417
        %2144 = vmatmul.mubr.bf16.gmra.mrb[0].mxu0 %v416
        %v2145 = vpop.f32.mrb[0].mxu0
        %v2146 = vadd.f32 %v705, %v2145
        %v2147 = vpop.f32.mrb[0].mxu0
        %v2148 = vpop.f32.mrb[0].mxu0
        %v2149 = vpop.f32.mrb[0].mxu0
        %2150 = vdwg.mxu0
        %2151 = vmatprep.subr.bf16.mxu0 0
        %2152 = vmatpush1.bf16.msra.mxu0 %v1535
        %2153 = vmatprep.subr.bf16.mxu0 0
        %2154 = vmatpush1.bf16.msra.mxu0 %v1542
        %2155 = vmatprep.subr.bf16.mxu0 0
        %2156 = vmatpush1.bf16.msra.mxu0 %v1549
        %2157 = vmatprep.subr.bf16.mxu0 0
        %2158 = vmatpush1.bf16.msra.mxu0 %v1556
        %2159 = vmatprep.subr.bf16.mxu0 0
        %2160 = vmatpush1.bf16.msra.mxu0 %v1563
        %2161 = vmatprep.subr.bf16.mxu0 0
        %2162 = vmatpush1.bf16.msra.mxu0 %v1570
        %2163 = vmatprep.subr.bf16.mxu0 0
        %2164 = vmatpush1.bf16.msra.mxu0 %v1577
        %2165 = vmatprep.subr.bf16.mxu0 0
        %2166 = vmatpush1.bf16.msra.mxu0 %v1584
        %2167 = vmatprep.subr.bf16.mxu0 0
        %2168 = vmatpush1.bf16.msra.mxu0 %v1591
        %2169 = vmatprep.subr.bf16.mxu0 0
        %2170 = vmatpush1.bf16.msra.mxu0 %v1598
        %2171 = vmatprep.subr.bf16.mxu0 0
        %2172 = vmatpush1.bf16.msra.mxu0 %v1605
        %2173 = vmatprep.subr.bf16.mxu0 0
        %2174 = vmatpush1.bf16.msra.mxu0 %v1612
        %2175 = vmatprep.subr.bf16.mxu0 0
        %2176 = vmatpush1.bf16.msra.mxu0 %v1619
        %2177 = vmatprep.subr.bf16.mxu0 0
        %2178 = vmatpush1.bf16.msra.mxu0 %v1626
        %2179 = vmatprep.subr.bf16.mxu0 0
        %2180 = vmatpush1.bf16.msra.mxu0 %v1633
        %2181 = vmatprep.subr.bf16.mxu0 0
        %2182 = vmatpush1.bf16.msra.mxu0 %v1640
        %2183 = vmatprep.mubr.bf16.mxu0 %v419
        %2184 = vmatmul.mubr.bf16.gmra.mrb[0].mxu0 %v418
        %v2185 = vpop.f32.mrb[0].mxu0
        %v2186 = vadd.f32 %v2146, %v2185
        %v2187 = vpop.f32.mrb[0].mxu0
        %v2188 = vpop.f32.mrb[0].mxu0
        %v2189 = vpop.f32.mrb[0].mxu0
        %2190 = vdwg.mxu0
        %v2191 = vsub.f32 0.0, %v1941
        %v2192 = vsub.f32 0.0, %v1943
        %v2193 = vsub.f32 0.0, %v2023
        %v2194 = vsub.f32 0.0, %v2025
        %v2195 = vsub.f32 0.0, %v2105
        %v2196 = vsub.f32 0.0, %v2107
        %v2197 = vsub.f32 0.0, %v2186
        %v2198 = vmul.f32 %v2191, 1.442695
        %v2199 = vpow.pop %v2198
        %v2200 = vmul.f32 %v2192, 1.442695
        %v2201 = vpow.pop %v2200
        %v2202 = vmul.f32 %v2193, 1.442695
        %v2203 = vpow.pop %v2202
        %v2204 = vmul.f32 %v2194, 1.442695
        %v2205 = vpow.pop %v2204
        %v2206 = vmul.f32 %v2195, 1.442695
        %v2207 = vpow.pop %v2206
        %v2208 = vmul.f32 %v2196, 1.442695
        %v2209 = vpow.pop %v2208
        %v2210 = vmul.f32 %v2197, 1.442695
        %v2211 = vpow.pop %v2210
        %v2212 = vadd.f32 %v2199, 1.0
        %v2213 = vadd.f32 %v2201, 1.0
        %v2214 = vadd.f32 %v2203, 1.0
        %v2215 = vadd.f32 %v2205, 1.0
        %v2216 = vadd.f32 %v2207, 1.0
        %v2217 = vadd.f32 %v2209, 1.0
        %v2218 = vadd.f32 %v2211, 1.0
        %v2219 = vrcp.pop %v2212
        %v2220 = vrcp.pop %v2213
        %v2221 = vrcp.pop %v2214
        %v2222 = vrcp.pop %v2215
        %v2223 = vrcp.pop %v2216
        %v2224 = vrcp.pop %v2217
        %v2225 = vrcp.pop %v2218
        %2226 = vst [vmem:[%s268] sm:$0xff] %v2219
        %2227 = vst [vmem:[%s268 + $0x8] sm:$0xff] %v2220
        %2228 = vst [vmem:[%s268 + $0x10] sm:$0xff] %v2221
        %2229 = vst [vmem:[%s268 + $0x18] sm:$0xff] %v2222
        %2230 = vst [vmem:[%s268 + $0x20] sm:$0xff] %v2223
        %2231 = vst [vmem:[%s268 + $0x28] sm:$0xff] %v2224
        %2232 = vst [vmem:[%s268 + $0x30] sm:$0xff] %v2225
        %s2233 = sand.u32 %s141, 1
        %s2234 = scalar_lea.sflag [#allocation4], %s2233
        %s2235 = sand.u32 %s141, 1
        %s2236 = smul.addr %s2235, 56
        %s2237 = scalar_lea.vmem [#allocation8], %s2236
        // Predicated region
        $region53: #{tpu_custom_call.1} parent=39 // pred_check
          %p2238 = pneg %p151
        $region54: #{tpu_custom_call.1} parent=39 // pred_check_branch
          %2240 = sbr.rel (%p2238) target = $region56
        $region55: #{tpu_custom_call.1} parent=39 // pred_region
          %s2242 = ssub.s32 896, 896
          %2243 = vsyncadd %s2234, %s2242
          %s2244 = smul.addr %s23, 7
          %s2245 = smul.addr %s2244, 128
          %s2246 = scalar_lea.hbm %s5, %s2245
          %s2248 = sshll.u32 %s2237, 4
          %s2249 = int_to_ptr.vmem [resolvable:$true] %s2248
          %2251 = dma.vmem_to_hbm [thread:$0]  %s2249, 896, %s2246, %s2234
        $region56: #{tpu_custom_call.1} parent=39 // pred_fallthru
          _
      $region40: #{tpu_custom_call.1} parent=5 // pred_fallthru
        _
      %p2252 = scmp.le.s32.totalorder 2, %s18
      // Predicated region
      $region57: #{tpu_custom_call.1} parent=5 // pred_check
        %p2253 = pneg %p2252
      $region58: #{tpu_custom_call.1} parent=5 // pred_check_branch
        %2255 = sbr.rel (%p2253) target = $region60
      $region59: #{tpu_custom_call.1} parent=5 // pred_region
        %s2256 = ssub.s32 %s18, 2
        // Predicated region
        $region61: #{tpu_custom_call.1} parent=59 // pred_check
          %p2257 = pneg %p157
        $region62: #{tpu_custom_call.1} parent=59 // pred_check_branch
          %2259 = sbr.rel (%p2257) target = $region64
        $region63: #{tpu_custom_call.1} parent=59 // pred_region
          %s2260 = sand.u32 %s142, 1
          %s2261 = scalar_lea.sflag [#allocation4], %s2260
          %s2262 = sand.u32 %s142, 1
          %s2263 = smul.addr %s2262, 56
          %s2264 = scalar_lea.vmem [#allocation8], %s2263
          %2265 = dma.done %s2261, 896
        $region64: #{tpu_custom_call.1} parent=59 // pred_fallthru
          _
      $region60: #{tpu_custom_call.1} parent=5 // pred_fallthru
        _
    $region6: #{tpu_custom_call.1} parent=1 // loop_footer
      %s22 = sadd.s32 1, %s18
    $region7: #{tpu_custom_call.1} parent=1 // loop_footer_branch
      %17 = sbr.rel target = $region3
    $region8: #{tpu_custom_call.1} parent=1 // loop_exit
      _
    %2266 = vsyncpa [#allocation3], 1
    %s2267 = scalar_lea.sflag [#allocation3], 1
    %2268 = vsyncpa %s2267, 1
    %2269 = vsyncpa [#allocation6], 1
    %2270 = vsyncpa [#allocation4], 1
    %s2271 = scalar_lea.sflag [#allocation4], 1
    %2272 = vsyncpa %s2271, 1

</llo_original>
